<compile_context>
chip_gen: v7x
topology: tpu7x:2x2x1
jax: 0.10.0
libtpu: 0.0.40
codegen_flags: <defaults>
</compile_context>

<pallas_src>
import functools

import jax
import jax.numpy as jnp
from jax import lax
from jax.experimental import pallas as pl
from jax.experimental.pallas import tpu as pltpu

_LANE = 128


# ---------------------------------------------------------------------------
# Shared kernel pieces
# ---------------------------------------------------------------------------
def _gru_cell(gi_t, h, whh, bhn, HP):
    """One GRU step, lane-group-aligned fused gates (PyTorch order r, z, n)."""
    gh = jnp.dot(h, whh, preferred_element_type=jnp.float32)        # (bt, 3*HP)
    r = jax.nn.sigmoid(gi_t[:, 0:HP] + gh[:, 0:HP])
    z = jax.nn.sigmoid(gi_t[:, HP:2 * HP] + gh[:, HP:2 * HP])
    n = jnp.tanh(gi_t[:, 2 * HP:3 * HP] + r * (gh[:, 2 * HP:3 * HP] + bhn))
    return (1.0 - z) * n + z * h


def _head(h_last, w1_ref, b1_ref, w2_ref, b2_ref):
    """hiddens_to_z0: Linear(H,50) -> Tanh -> Linear(50, OUT_W) (lane-dense)."""
    a1 = jnp.tanh(jnp.dot(h_last, w1_ref[...],
                          preferred_element_type=jnp.float32) + b1_ref[...])
    return jnp.dot(a1, w2_ref[...],
                   preferred_element_type=jnp.float32) + b2_ref[...]


# ---------------------------------------------------------------------------
# Kernels
# ---------------------------------------------------------------------------
def _gru_kernel_unrolled(x_ref, wih_ref, bih_ref, whh_ref, bhn_ref,
                         w1_ref, b1_ref, w2_ref, b2_ref, out_ref, *, HP):
    """Small tiles: gi kept as a value (vregs), recurrence fully unrolled."""
    T, bt, din = x_ref.shape
    # Hoisted input projection for all T steps (single MXU matmul).
    gi_all = (jnp.dot(x_ref[...].reshape(T * bt, din), wih_ref[...],
                      preferred_element_type=jnp.float32)
              + bih_ref[...]).reshape(T, bt, 3 * HP)
    whh = whh_ref[...]                    # (HP, 3*HP)
    bhn = bhn_ref[...]                    # (1, HP)  hidden bias of the n gate
    h = jnp.zeros((bt, HP), jnp.float32)  # padded lanes stay exactly 0
    for t in range(T):                    # static indices -> free selections
        h = _gru_cell(gi_all[t], h, whh, bhn, HP)
    out_ref[...] = _head(h, w1_ref, b1_ref, w2_ref, b2_ref)


def _gru_kernel_scratch(x_ref, wih_ref, bih_ref, whh_ref, bhn_ref,
                        w1_ref, b1_ref, w2_ref, b2_ref, out_ref, gi_scr,
                        *, HP, unroll):
    """Large tiles: gi staged in a VMEM scratch, partially unrolled loop."""
    T, bt, din = x_ref.shape
    gi_scr[...] = (jnp.dot(x_ref[...].reshape(T * bt, din), wih_ref[...],
                           preferred_element_type=jnp.float32)
                   + bih_ref[...]).reshape(T, bt, 3 * HP)
    whh = whh_ref[...]
    bhn = bhn_ref[...]

    def step(t, h):
        return _gru_cell(gi_scr[t], h, whh, bhn, HP)

    h_last = lax.fori_loop(0, T, step, jnp.zeros((bt, HP), jnp.float32),
                           unroll=unroll)
    out_ref[...] = _head(h_last, w1_ref, b1_ref, w2_ref, b2_ref)


# ---------------------------------------------------------------------------
# pallas_call wrapper (batch-tiled grid)
# ---------------------------------------------------------------------------
def _pick_batch_tile(B, T, HP):
    """Largest multiple-of-8 divisor of B (<=256) whose gi tile fits ~4 MiB."""
    if B % 8 != 0:
        return B                          # single tile; block == full batch dim
    budget_elems = (4 << 20) // 4
    start = (min(B, 256) // 8) * 8
    for bt in range(start, 7, -8):
        if B % bt == 0 and T * bt * 3 * HP <= budget_elems:
            return bt
    return 8


def _gru_encoder_pallas(x, packed, *, T, B):
    """x: (T, B, Din) f32. Returns (B, OUT_W) = [mean | std_pre_abs | 0-pad]."""
    wih_p, bih_p, whh_p, bhn_p, w1_p, b1, w2_p, b2_p = packed
    HP = whh_p.shape[0]
    OUT_W = w2_p.shape[-1]
    Din = x.shape[-1]

    bt = _pick_batch_tile(B, T, HP)
    n_tiles = B // bt
    weights = (wih_p, bih_p, whh_p, bhn_p, w1_p, b1, w2_p, b2_p)

    in_specs = [pl.BlockSpec((T, bt, Din), lambda b: (0, b, 0))]
    in_specs += [pl.BlockSpec(w.shape, lambda b: (0, 0)) for w in weights]
    out_spec = pl.BlockSpec((bt, OUT_W), lambda b: (b, 0))

    if T * bt <= 512:          # small tile: keep gi in vregs, full unroll
        kernel = functools.partial(_gru_kernel_unrolled, HP=HP)
        scratch_shapes = ()
    else:                      # big tile: VMEM-staged gi, partial unroll
        kernel = functools.partial(_gru_kernel_scratch, HP=HP, unroll=min(T, 8))
        scratch_shapes = [pltpu.VMEM((T, bt, 3 * HP), jnp.float32)]

    return pl.pallas_call(
        kernel,
        out_shape=jax.ShapeDtypeStruct((B, OUT_W), jnp.float32),
        grid=(n_tiles,),
        in_specs=in_specs,
        out_specs=out_spec,
        scratch_shapes=scratch_shapes,
        compiler_params=pltpu.CompilerParams(
            dimension_semantics=("parallel",)),
    )(x, *weights)


# ---------------------------------------------------------------------------
# Parameter packing: gate fusion, lane-group alignment, head fusion
# ---------------------------------------------------------------------------
def _pack_params(params):
    wih, whh, bih, bhh, w1, b1, wm, bm, ws, bs = params
    din, H = wih.shape[1], wih.shape[2]
    L = wm.shape[-1]
    HP = ((H + _LANE - 1) // _LANE) * _LANE
    OUT_W = ((2 * L + _LANE - 1) // _LANE) * _LANE

    def gate_cols(mats, rows):
        out = jnp.zeros((rows, 3 * HP), jnp.float32)
        for g in range(3):
            out = out.at[:, g * HP:g * HP + H].set(mats[g])
        return out

    wih_p = gate_cols(wih, din)                                      # (Din, 3*HP)
    whh_p = jnp.zeros((HP, 3 * HP), jnp.float32)
    for g in range(3):
        whh_p = whh_p.at[:H, g * HP:g * HP + H].set(whh[g])          # (HP, 3*HP)
    # r/z biases pre-summed (b_ih + b_hh); n keeps b_ih; b_hn separate.
    bih_p = gate_cols((bih[0] + bhh[0], bih[1] + bhh[1], bih[2]), 1)  # (1, 3*HP)
    bhn_p = jnp.zeros((1, HP), jnp.float32).at[:, :H].set(bhh[2])     # (1, HP)
    # Head: pad rows of W1 (padded h lanes are zero anyway) and fuse
    # [mean | std] into one lane-dense OUT_W-wide output projection.
    w1_p = jnp.zeros((HP, w1.shape[-1]), jnp.float32).at[:H, :].set(w1)
    w2_p = (jnp.zeros((w1.shape[-1], OUT_W), jnp.float32)
            .at[:, :L].set(wm).at[:, L:2 * L].set(ws))
    b2_p = (jnp.zeros((1, OUT_W), jnp.float32)
            .at[:, :L].set(bm).at[:, L:2 * L].set(bs))
    return wih_p, bih_p, whh_p, bhn_p, w1_p, b1, w2_p, b2_p


# ---------------------------------------------------------------------------
# Wrapper reproducing Encoder_z0_RNN.forward (use_delta_t=True)
# ---------------------------------------------------------------------------
@functools.partial(jax.jit, static_argnames=("run_backwards",))
def encoder_z0_rnn_forward(data, time_steps, params, run_backwards=True):
    # data: (B, T, D); time_steps: (T,)
    B, T, D = data.shape
    x = jnp.transpose(data, (1, 0, 2))              # (T, B, D) == permute(1,0,2)
    if run_backwards:
        x = x[::-1]                                 # utils.reverse along time
    delta_t = time_steps[1:] - time_steps[:-1]
    if run_backwards:
        delta_t = delta_t[::-1]
    delta_t = jnp.concatenate([delta_t, jnp.zeros((1,), dtype=time_steps.dtype)])
    delta_t = jnp.broadcast_to(delta_t[:, None, None], (T, B, 1))
    x = jnp.concatenate([delta_t, x], axis=-1).astype(jnp.float32)   # (T, B, D+1)

    L = params[6].shape[-1]                          # wm: (50, L)
    packed = _pack_params(params)
    out = _gru_encoder_pallas(x, packed, T=T, B=B)   # (B, OUT_W)
    mean = out[:, :L]
    std = jnp.abs(out[:, L:2 * L])                   # abs fused by XLA for free
    return mean[None], std[None]                     # (1, B, L) each


# ---------------------------------------------------------------------------
# Pure-JAX reference (lax.scan GRU) used only to sanity-check the kernel.
# ---------------------------------------------------------------------------
def _reference_forward(data, time_steps, params, run_backwards=True):
    B, T, D = data.shape
    x = jnp.transpose(data, (1, 0, 2))
    if run_backwards:
        x = x[::-1]
    delta_t = time_steps[1:] - time_steps[:-1]
    if run_backwards:
        delta_t = delta_t[::-1]
    delta_t = jnp.concatenate([delta_t, jnp.zeros((1,), dtype=time_steps.dtype)])
    delta_t = jnp.broadcast_to(delta_t[:, None, None], (T, B, 1))
    x = jnp.concatenate([delta_t, x], axis=-1).astype(jnp.float32)

    wih, whh, bih, bhh, w1, b1, wm, bm, ws, bs = params
    H = whh.shape[-1]

    def step(h, x_t):
        gi = [x_t @ wih[g] + bih[g] for g in range(3)]
        gh = [h @ whh[g] + bhh[g] for g in range(3)]
        r = jax.nn.sigmoid(gi[0] + gh[0])
        z = jax.nn.sigmoid(gi[1] + gh[1])
        n = jnp.tanh(gi[2] + r * gh[2])
        return (1.0 - z) * n + z * h, None

    h0 = jnp.zeros((B, H), jnp.float32)
    h_last, _ = lax.scan(step, h0, x)
    a1 = jnp.tanh(h_last @ w1 + b1)
    mean = a1 @ wm + bm
    std = jnp.abs(a1 @ ws + bs)
    return mean[None], std[None]


def init_params(key, input_dim, hidden, latent_dim):
    din = input_dim + 1   # use_delta_t=True
    ks = jax.random.split(key, 10)
    s = 0.1
    wih = s * jax.random.normal(ks[0], (3, din, hidden), jnp.float32)
    whh = s * jax.random.normal(ks[1], (3, hidden, hidden), jnp.float32)
    bih = s * jax.random.normal(ks[2], (3, 1, hidden), jnp.float32)
    bhh = s * jax.random.normal(ks[3], (3, 1, hidden), jnp.float32)
    w1 = s * jax.random.normal(ks[4], (hidden, 50), jnp.float32)
    b1 = jnp.zeros((1, 50), jnp.float32)
    wm = s * jax.random.normal(ks[5], (50, latent_dim), jnp.float32)
    bm = jnp.zeros((1, latent_dim), jnp.float32)
    ws = s * jax.random.normal(ks[6], (50, latent_dim), jnp.float32)
    bs = jnp.zeros((1, latent_dim), jnp.float32)
    return (wih, whh, bih, bhh, w1, b1, wm, bm, ws, bs)


if __name__ == "__main__":
    # Small shapes: batch=8 trajectories, 8 time points, input_dim=4,
    # gru hidden (lstm_output_size)=32, latent_dim=16.
    B, T, D, H, L = 8, 8, 4, 32, 16

    key = jax.random.PRNGKey(0)
    k_data, k_param = jax.random.split(key)
    data = jax.random.normal(k_data, (B, T, D), jnp.float32)
    time_steps = jnp.linspace(0.0, 1.0, T).astype(jnp.float32)
    params = init_params(k_param, D, H, L)

    mean, std = encoder_z0_rnn_forward(data, time_steps, params, run_backwards=True)
    jax.block_until_ready((mean, std))

    mean_ref, std_ref = _reference_forward(data, time_steps, params, run_backwards=True)
    assert mean.shape == (1, B, L) and std.shape == (1, B, L)
    assert jnp.allclose(mean, mean_ref, atol=1e-4, rtol=1e-4)
    assert jnp.allclose(std, std_ref, atol=1e-4, rtol=1e-4)

    print("KERNEL_OK")
</pallas_src>

<mosaic_0001>
module attributes {stable_mosaic.version = 11 : i64} {
  func.func @_gru_kernel_unrolled(%arg0: i32, %arg1: memref<8x8x5xf32, #tpu.memory_space<vmem>>, %arg2: memref<5x384xf32, #tpu.memory_space<vmem>>, %arg3: memref<1x384xf32, #tpu.memory_space<vmem>>, %arg4: memref<128x384xf32, #tpu.memory_space<vmem>>, %arg5: memref<1x128xf32, #tpu.memory_space<vmem>>, %arg6: memref<128x50xf32, #tpu.memory_space<vmem>>, %arg7: memref<1x50xf32, #tpu.memory_space<vmem>>, %arg8: memref<50x128xf32, #tpu.memory_space<vmem>>, %arg9: memref<1x128xf32, #tpu.memory_space<vmem>>, %arg10: memref<8x128xf32, #tpu.memory_space<vmem>>) attributes {dimension_semantics = [#tpu.dimension_semantics<parallel>], iteration_bounds = array<i64: 1>, scalar_prefetch = 0 : i64, scratch_operands = 0 : i64, tpu.core_type = #tpu.core_type<tc>, window_params = [{transform_indices = @transform_0, window_bounds = array<i64: 8, 8, 5>}, {pipeline_mode = #tpu.pipeline_mode<synchronous>, transform_indices = @transform_1, window_bounds = array<i64: 5, 384>}, {pipeline_mode = #tpu.pipeline_mode<synchronous>, transform_indices = @transform_2, window_bounds = array<i64: 1, 384>}, {pipeline_mode = #tpu.pipeline_mode<synchronous>, transform_indices = @transform_3, window_bounds = array<i64: 128, 384>}, {pipeline_mode = #tpu.pipeline_mode<synchronous>, transform_indices = @transform_4, window_bounds = array<i64: 1, 128>}, {pipeline_mode = #tpu.pipeline_mode<synchronous>, transform_indices = @transform_5, window_bounds = array<i64: 128, 50>}, {pipeline_mode = #tpu.pipeline_mode<synchronous>, transform_indices = @transform_6, window_bounds = array<i64: 1, 50>}, {pipeline_mode = #tpu.pipeline_mode<synchronous>, transform_indices = @transform_7, window_bounds = array<i64: 50, 128>}, {pipeline_mode = #tpu.pipeline_mode<synchronous>, transform_indices = @transform_8, window_bounds = array<i64: 1, 128>}, {transform_indices = @transform_9, window_bounds = array<i64: 8, 128>}]} {
    %c0 = arith.constant 0 : index
    %c0_0 = arith.constant 0 : index
    %c0_1 = arith.constant 0 : index
    %0 = vector.load %arg1[%c0, %c0_0, %c0_1] : memref<8x8x5xf32, #tpu.memory_space<vmem>>, vector<8x8x5xf32>
    %1 = vector.shape_cast %0 : vector<8x8x5xf32> to vector<64x5xf32>
    %c0_2 = arith.constant 0 : index
    %c0_3 = arith.constant 0 : index
    %2 = vector.load %arg2[%c0_2, %c0_3] : memref<5x384xf32, #tpu.memory_space<vmem>>, vector<5x384xf32>
    %cst = arith.constant dense<0.000000e+00> : vector<64x384xf32>
    %3 = tpu.matmul %1, %2, %cst {dimension_numbers = #tpu.dot_dimension_numbers<[1], [0], [0], [1], [0, 0, 1, 1], [], []>} : vector<64x5xf32>, vector<5x384xf32>, vector<64x384xf32> -> vector<64x384xf32>
    %c0_4 = arith.constant 0 : index
    %c0_5 = arith.constant 0 : index
    %4 = vector.load %arg3[%c0_4, %c0_5] : memref<1x384xf32, #tpu.memory_space<vmem>>, vector<1x384xf32>
    %5 = vector.broadcast %4 : vector<1x384xf32> to vector<64x384xf32>
    %6 = arith.addf %3, %5 : vector<64x384xf32>
    %7 = vector.shape_cast %6 : vector<64x384xf32> to vector<8x8x384xf32>
    %c0_6 = arith.constant 0 : index
    %c0_7 = arith.constant 0 : index
    %8 = vector.load %arg4[%c0_6, %c0_7] : memref<128x384xf32, #tpu.memory_space<vmem>>, vector<128x384xf32>
    %c0_8 = arith.constant 0 : index
    %c0_9 = arith.constant 0 : index
    %9 = vector.load %arg5[%c0_8, %c0_9] : memref<1x128xf32, #tpu.memory_space<vmem>>, vector<1x128xf32>
    %cst_10 = arith.constant 0.000000e+00 : f32
    %10 = vector.broadcast %cst_10 : f32 to vector<8x128xf32>
    %11 = vector.extract_strided_slice %7 {offsets = [0, 0, 0], sizes = [1, 8, 384], strides = [1, 1, 1]} : vector<8x8x384xf32> to vector<1x8x384xf32>
    %12 = vector.shape_cast %11 : vector<1x8x384xf32> to vector<8x384xf32>
    %cst_11 = arith.constant dense<0.000000e+00> : vector<8x384xf32>
    %13 = tpu.matmul %10, %8, %cst_11 {dimension_numbers = #tpu.dot_dimension_numbers<[1], [0], [0], [1], [0, 0, 1, 1], [], []>} : vector<8x128xf32>, vector<128x384xf32>, vector<8x384xf32> -> vector<8x384xf32>
    %14 = vector.extract_strided_slice %12 {offsets = [0, 0], sizes = [8, 128], strides = [1, 1]} : vector<8x384xf32> to vector<8x128xf32>
    %15 = vector.extract_strided_slice %13 {offsets = [0, 0], sizes = [8, 128], strides = [1, 1]} : vector<8x384xf32> to vector<8x128xf32>
    %16 = arith.addf %14, %15 : vector<8x128xf32>
    %17 = arith.negf %16 : vector<8x128xf32>
    %18 = math.exp %17 : vector<8x128xf32>
    %cst_12 = arith.constant 1.000000e+00 : f32
    %19 = vector.broadcast %cst_12 : f32 to vector<8x128xf32>
    %20 = arith.addf %19, %18 : vector<8x128xf32>
    %21 = arith.divf %19, %20 : vector<8x128xf32>
    %22 = vector.extract_strided_slice %12 {offsets = [0, 128], sizes = [8, 128], strides = [1, 1]} : vector<8x384xf32> to vector<8x128xf32>
    %23 = vector.extract_strided_slice %13 {offsets = [0, 128], sizes = [8, 128], strides = [1, 1]} : vector<8x384xf32> to vector<8x128xf32>
    %24 = arith.addf %22, %23 : vector<8x128xf32>
    %25 = arith.negf %24 : vector<8x128xf32>
    %26 = math.exp %25 : vector<8x128xf32>
    %cst_13 = arith.constant 1.000000e+00 : f32
    %27 = vector.broadcast %cst_13 : f32 to vector<8x128xf32>
    %28 = arith.addf %27, %26 : vector<8x128xf32>
    %29 = arith.divf %27, %28 : vector<8x128xf32>
    %30 = vector.extract_strided_slice %12 {offsets = [0, 256], sizes = [8, 128], strides = [1, 1]} : vector<8x384xf32> to vector<8x128xf32>
    %31 = vector.extract_strided_slice %13 {offsets = [0, 256], sizes = [8, 128], strides = [1, 1]} : vector<8x384xf32> to vector<8x128xf32>
    %32 = vector.broadcast %9 : vector<1x128xf32> to vector<8x128xf32>
    %33 = arith.addf %31, %32 : vector<8x128xf32>
    %34 = arith.mulf %21, %33 : vector<8x128xf32>
    %35 = arith.addf %30, %34 : vector<8x128xf32>
    %36 = math.tanh %35 : vector<8x128xf32>
    %cst_14 = arith.constant 1.000000e+00 : f32
    %37 = vector.broadcast %cst_14 : f32 to vector<8x128xf32>
    %38 = arith.subf %37, %29 : vector<8x128xf32>
    %39 = arith.mulf %38, %36 : vector<8x128xf32>
    %40 = arith.mulf %29, %10 : vector<8x128xf32>
    %41 = arith.addf %39, %40 : vector<8x128xf32>
    %42 = vector.extract_strided_slice %7 {offsets = [1, 0, 0], sizes = [1, 8, 384], strides = [1, 1, 1]} : vector<8x8x384xf32> to vector<1x8x384xf32>
    %43 = vector.shape_cast %42 : vector<1x8x384xf32> to vector<8x384xf32>
    %cst_15 = arith.constant dense<0.000000e+00> : vector<8x384xf32>
    %44 = tpu.matmul %41, %8, %cst_15 {dimension_numbers = #tpu.dot_dimension_numbers<[1], [0], [0], [1], [0, 0, 1, 1], [], []>} : vector<8x128xf32>, vector<128x384xf32>, vector<8x384xf32> -> vector<8x384xf32>
    %45 = vector.extract_strided_slice %43 {offsets = [0, 0], sizes = [8, 128], strides = [1, 1]} : vector<8x384xf32> to vector<8x128xf32>
    %46 = vector.extract_strided_slice %44 {offsets = [0, 0], sizes = [8, 128], strides = [1, 1]} : vector<8x384xf32> to vector<8x128xf32>
    %47 = arith.addf %45, %46 : vector<8x128xf32>
    %48 = arith.negf %47 : vector<8x128xf32>
    %49 = math.exp %48 : vector<8x128xf32>
    %cst_16 = arith.constant 1.000000e+00 : f32
    %50 = vector.broadcast %cst_16 : f32 to vector<8x128xf32>
    %51 = arith.addf %50, %49 : vector<8x128xf32>
    %52 = arith.divf %50, %51 : vector<8x128xf32>
    %53 = vector.extract_strided_slice %43 {offsets = [0, 128], sizes = [8, 128], strides = [1, 1]} : vector<8x384xf32> to vector<8x128xf32>
    %54 = vector.extract_strided_slice %44 {offsets = [0, 128], sizes = [8, 128], strides = [1, 1]} : vector<8x384xf32> to vector<8x128xf32>
    %55 = arith.addf %53, %54 : vector<8x128xf32>
    %56 = arith.negf %55 : vector<8x128xf32>
    %57 = math.exp %56 : vector<8x128xf32>
    %cst_17 = arith.constant 1.000000e+00 : f32
    %58 = vector.broadcast %cst_17 : f32 to vector<8x128xf32>
    %59 = arith.addf %58, %57 : vector<8x128xf32>
    %60 = arith.divf %58, %59 : vector<8x128xf32>
    %61 = vector.extract_strided_slice %43 {offsets = [0, 256], sizes = [8, 128], strides = [1, 1]} : vector<8x384xf32> to vector<8x128xf32>
    %62 = vector.extract_strided_slice %44 {offsets = [0, 256], sizes = [8, 128], strides = [1, 1]} : vector<8x384xf32> to vector<8x128xf32>
    %63 = vector.broadcast %9 : vector<1x128xf32> to vector<8x128xf32>
    %64 = arith.addf %62, %63 : vector<8x128xf32>
    %65 = arith.mulf %52, %64 : vector<8x128xf32>
    %66 = arith.addf %61, %65 : vector<8x128xf32>
    %67 = math.tanh %66 : vector<8x128xf32>
    %cst_18 = arith.constant 1.000000e+00 : f32
    %68 = vector.broadcast %cst_18 : f32 to vector<8x128xf32>
    %69 = arith.subf %68, %60 : vector<8x128xf32>
    %70 = arith.mulf %69, %67 : vector<8x128xf32>
    %71 = arith.mulf %60, %41 : vector<8x128xf32>
    %72 = arith.addf %70, %71 : vector<8x128xf32>
    %73 = vector.extract_strided_slice %7 {offsets = [2, 0, 0], sizes = [1, 8, 384], strides = [1, 1, 1]} : vector<8x8x384xf32> to vector<1x8x384xf32>
    %74 = vector.shape_cast %73 : vector<1x8x384xf32> to vector<8x384xf32>
    %cst_19 = arith.constant dense<0.000000e+00> : vector<8x384xf32>
    %75 = tpu.matmul %72, %8, %cst_19 {dimension_numbers = #tpu.dot_dimension_numbers<[1], [0], [0], [1], [0, 0, 1, 1], [], []>} : vector<8x128xf32>, vector<128x384xf32>, vector<8x384xf32> -> vector<8x384xf32>
    %76 = vector.extract_strided_slice %74 {offsets = [0, 0], sizes = [8, 128], strides = [1, 1]} : vector<8x384xf32> to vector<8x128xf32>
    %77 = vector.extract_strided_slice %75 {offsets = [0, 0], sizes = [8, 128], strides = [1, 1]} : vector<8x384xf32> to vector<8x128xf32>
    %78 = arith.addf %76, %77 : vector<8x128xf32>
    %79 = arith.negf %78 : vector<8x128xf32>
    %80 = math.exp %79 : vector<8x128xf32>
    %cst_20 = arith.constant 1.000000e+00 : f32
    %81 = vector.broadcast %cst_20 : f32 to vector<8x128xf32>
    %82 = arith.addf %81, %80 : vector<8x128xf32>
    %83 = arith.divf %81, %82 : vector<8x128xf32>
    %84 = vector.extract_strided_slice %74 {offsets = [0, 128], sizes = [8, 128], strides = [1, 1]} : vector<8x384xf32> to vector<8x128xf32>
    %85 = vector.extract_strided_slice %75 {offsets = [0, 128], sizes = [8, 128], strides = [1, 1]} : vector<8x384xf32> to vector<8x128xf32>
    %86 = arith.addf %84, %85 : vector<8x128xf32>
    %87 = arith.negf %86 : vector<8x128xf32>
    %88 = math.exp %87 : vector<8x128xf32>
    %cst_21 = arith.constant 1.000000e+00 : f32
    %89 = vector.broadcast %cst_21 : f32 to vector<8x128xf32>
    %90 = arith.addf %89, %88 : vector<8x128xf32>
    %91 = arith.divf %89, %90 : vector<8x128xf32>
    %92 = vector.extract_strided_slice %74 {offsets = [0, 256], sizes = [8, 128], strides = [1, 1]} : vector<8x384xf32> to vector<8x128xf32>
    %93 = vector.extract_strided_slice %75 {offsets = [0, 256], sizes = [8, 128], strides = [1, 1]} : vector<8x384xf32> to vector<8x128xf32>
    %94 = vector.broadcast %9 : vector<1x128xf32> to vector<8x128xf32>
    %95 = arith.addf %93, %94 : vector<8x128xf32>
    %96 = arith.mulf %83, %95 : vector<8x128xf32>
    %97 = arith.addf %92, %96 : vector<8x128xf32>
    %98 = math.tanh %97 : vector<8x128xf32>
    %cst_22 = arith.constant 1.000000e+00 : f32
    %99 = vector.broadcast %cst_22 : f32 to vector<8x128xf32>
    %100 = arith.subf %99, %91 : vector<8x128xf32>
    %101 = arith.mulf %100, %98 : vector<8x128xf32>
    %102 = arith.mulf %91, %72 : vector<8x128xf32>
    %103 = arith.addf %101, %102 : vector<8x128xf32>
    %104 = vector.extract_strided_slice %7 {offsets = [3, 0, 0], sizes = [1, 8, 384], strides = [1, 1, 1]} : vector<8x8x384xf32> to vector<1x8x384xf32>
    %105 = vector.shape_cast %104 : vector<1x8x384xf32> to vector<8x384xf32>
    %cst_23 = arith.constant dense<0.000000e+00> : vector<8x384xf32>
    %106 = tpu.matmul %103, %8, %cst_23 {dimension_numbers = #tpu.dot_dimension_numbers<[1], [0], [0], [1], [0, 0, 1, 1], [], []>} : vector<8x128xf32>, vector<128x384xf32>, vector<8x384xf32> -> vector<8x384xf32>
    %107 = vector.extract_strided_slice %105 {offsets = [0, 0], sizes = [8, 128], strides = [1, 1]} : vector<8x384xf32> to vector<8x128xf32>
    %108 = vector.extract_strided_slice %106 {offsets = [0, 0], sizes = [8, 128], strides = [1, 1]} : vector<8x384xf32> to vector<8x128xf32>
    %109 = arith.addf %107, %108 : vector<8x128xf32>
    %110 = arith.negf %109 : vector<8x128xf32>
    %111 = math.exp %110 : vector<8x128xf32>
    %cst_24 = arith.constant 1.000000e+00 : f32
    %112 = vector.broadcast %cst_24 : f32 to vector<8x128xf32>
    %113 = arith.addf %112, %111 : vector<8x128xf32>
    %114 = arith.divf %112, %113 : vector<8x128xf32>
    %115 = vector.extract_strided_slice %105 {offsets = [0, 128], sizes = [8, 128], strides = [1, 1]} : vector<8x384xf32> to vector<8x128xf32>
    %116 = vector.extract_strided_slice %106 {offsets = [0, 128], sizes = [8, 128], strides = [1, 1]} : vector<8x384xf32> to vector<8x128xf32>
    %117 = arith.addf %115, %116 : vector<8x128xf32>
    %118 = arith.negf %117 : vector<8x128xf32>
    %119 = math.exp %118 : vector<8x128xf32>
    %cst_25 = arith.constant 1.000000e+00 : f32
    %120 = vector.broadcast %cst_25 : f32 to vector<8x128xf32>
    %121 = arith.addf %120, %119 : vector<8x128xf32>
    %122 = arith.divf %120, %121 : vector<8x128xf32>
    %123 = vector.extract_strided_slice %105 {offsets = [0, 256], sizes = [8, 128], strides = [1, 1]} : vector<8x384xf32> to vector<8x128xf32>
    %124 = vector.extract_strided_slice %106 {offsets = [0, 256], sizes = [8, 128], strides = [1, 1]} : vector<8x384xf32> to vector<8x128xf32>
    %125 = vector.broadcast %9 : vector<1x128xf32> to vector<8x128xf32>
    %126 = arith.addf %124, %125 : vector<8x128xf32>
    %127 = arith.mulf %114, %126 : vector<8x128xf32>
    %128 = arith.addf %123, %127 : vector<8x128xf32>
    %129 = math.tanh %128 : vector<8x128xf32>
    %cst_26 = arith.constant 1.000000e+00 : f32
    %130 = vector.broadcast %cst_26 : f32 to vector<8x128xf32>
    %131 = arith.subf %130, %122 : vector<8x128xf32>
    %132 = arith.mulf %131, %129 : vector<8x128xf32>
    %133 = arith.mulf %122, %103 : vector<8x128xf32>
    %134 = arith.addf %132, %133 : vector<8x128xf32>
    %135 = vector.extract_strided_slice %7 {offsets = [4, 0, 0], sizes = [1, 8, 384], strides = [1, 1, 1]} : vector<8x8x384xf32> to vector<1x8x384xf32>
    %136 = vector.shape_cast %135 : vector<1x8x384xf32> to vector<8x384xf32>
    %cst_27 = arith.constant dense<0.000000e+00> : vector<8x384xf32>
    %137 = tpu.matmul %134, %8, %cst_27 {dimension_numbers = #tpu.dot_dimension_numbers<[1], [0], [0], [1], [0, 0, 1, 1], [], []>} : vector<8x128xf32>, vector<128x384xf32>, vector<8x384xf32> -> vector<8x384xf32>
    %138 = vector.extract_strided_slice %136 {offsets = [0, 0], sizes = [8, 128], strides = [1, 1]} : vector<8x384xf32> to vector<8x128xf32>
    %139 = vector.extract_strided_slice %137 {offsets = [0, 0], sizes = [8, 128], strides = [1, 1]} : vector<8x384xf32> to vector<8x128xf32>
    %140 = arith.addf %138, %139 : vector<8x128xf32>
    %141 = arith.negf %140 : vector<8x128xf32>
    %142 = math.exp %141 : vector<8x128xf32>
    %cst_28 = arith.constant 1.000000e+00 : f32
    %143 = vector.broadcast %cst_28 : f32 to vector<8x128xf32>
    %144 = arith.addf %143, %142 : vector<8x128xf32>
    %145 = arith.divf %143, %144 : vector<8x128xf32>
    %146 = vector.extract_strided_slice %136 {offsets = [0, 128], sizes = [8, 128], strides = [1, 1]} : vector<8x384xf32> to vector<8x128xf32>
    %147 = vector.extract_strided_slice %137 {offsets = [0, 128], sizes = [8, 128], strides = [1, 1]} : vector<8x384xf32> to vector<8x128xf32>
    %148 = arith.addf %146, %147 : vector<8x128xf32>
    %149 = arith.negf %148 : vector<8x128xf32>
    %150 = math.exp %149 : vector<8x128xf32>
    %cst_29 = arith.constant 1.000000e+00 : f32
    %151 = vector.broadcast %cst_29 : f32 to vector<8x128xf32>
    %152 = arith.addf %151, %150 : vector<8x128xf32>
    %153 = arith.divf %151, %152 : vector<8x128xf32>
    %154 = vector.extract_strided_slice %136 {offsets = [0, 256], sizes = [8, 128], strides = [1, 1]} : vector<8x384xf32> to vector<8x128xf32>
    %155 = vector.extract_strided_slice %137 {offsets = [0, 256], sizes = [8, 128], strides = [1, 1]} : vector<8x384xf32> to vector<8x128xf32>
    %156 = vector.broadcast %9 : vector<1x128xf32> to vector<8x128xf32>
    %157 = arith.addf %155, %156 : vector<8x128xf32>
    %158 = arith.mulf %145, %157 : vector<8x128xf32>
    %159 = arith.addf %154, %158 : vector<8x128xf32>
    %160 = math.tanh %159 : vector<8x128xf32>
    %cst_30 = arith.constant 1.000000e+00 : f32
    %161 = vector.broadcast %cst_30 : f32 to vector<8x128xf32>
    %162 = arith.subf %161, %153 : vector<8x128xf32>
    %163 = arith.mulf %162, %160 : vector<8x128xf32>
    %164 = arith.mulf %153, %134 : vector<8x128xf32>
    %165 = arith.addf %163, %164 : vector<8x128xf32>
    %166 = vector.extract_strided_slice %7 {offsets = [5, 0, 0], sizes = [1, 8, 384], strides = [1, 1, 1]} : vector<8x8x384xf32> to vector<1x8x384xf32>
    %167 = vector.shape_cast %166 : vector<1x8x384xf32> to vector<8x384xf32>
    %cst_31 = arith.constant dense<0.000000e+00> : vector<8x384xf32>
    %168 = tpu.matmul %165, %8, %cst_31 {dimension_numbers = #tpu.dot_dimension_numbers<[1], [0], [0], [1], [0, 0, 1, 1], [], []>} : vector<8x128xf32>, vector<128x384xf32>, vector<8x384xf32> -> vector<8x384xf32>
    %169 = vector.extract_strided_slice %167 {offsets = [0, 0], sizes = [8, 128], strides = [1, 1]} : vector<8x384xf32> to vector<8x128xf32>
    %170 = vector.extract_strided_slice %168 {offsets = [0, 0], sizes = [8, 128], strides = [1, 1]} : vector<8x384xf32> to vector<8x128xf32>
    %171 = arith.addf %169, %170 : vector<8x128xf32>
    %172 = arith.negf %171 : vector<8x128xf32>
    %173 = math.exp %172 : vector<8x128xf32>
    %cst_32 = arith.constant 1.000000e+00 : f32
    %174 = vector.broadcast %cst_32 : f32 to vector<8x128xf32>
    %175 = arith.addf %174, %173 : vector<8x128xf32>
    %176 = arith.divf %174, %175 : vector<8x128xf32>
    %177 = vector.extract_strided_slice %167 {offsets = [0, 128], sizes = [8, 128], strides = [1, 1]} : vector<8x384xf32> to vector<8x128xf32>
    %178 = vector.extract_strided_slice %168 {offsets = [0, 128], sizes = [8, 128], strides = [1, 1]} : vector<8x384xf32> to vector<8x128xf32>
    %179 = arith.addf %177, %178 : vector<8x128xf32>
    %180 = arith.negf %179 : vector<8x128xf32>
    %181 = math.exp %180 : vector<8x128xf32>
    %cst_33 = arith.constant 1.000000e+00 : f32
    %182 = vector.broadcast %cst_33 : f32 to vector<8x128xf32>
    %183 = arith.addf %182, %181 : vector<8x128xf32>
    %184 = arith.divf %182, %183 : vector<8x128xf32>
    %185 = vector.extract_strided_slice %167 {offsets = [0, 256], sizes = [8, 128], strides = [1, 1]} : vector<8x384xf32> to vector<8x128xf32>
    %186 = vector.extract_strided_slice %168 {offsets = [0, 256], sizes = [8, 128], strides = [1, 1]} : vector<8x384xf32> to vector<8x128xf32>
    %187 = vector.broadcast %9 : vector<1x128xf32> to vector<8x128xf32>
    %188 = arith.addf %186, %187 : vector<8x128xf32>
    %189 = arith.mulf %176, %188 : vector<8x128xf32>
    %190 = arith.addf %185, %189 : vector<8x128xf32>
    %191 = math.tanh %190 : vector<8x128xf32>
    %cst_34 = arith.constant 1.000000e+00 : f32
    %192 = vector.broadcast %cst_34 : f32 to vector<8x128xf32>
    %193 = arith.subf %192, %184 : vector<8x128xf32>
    %194 = arith.mulf %193, %191 : vector<8x128xf32>
    %195 = arith.mulf %184, %165 : vector<8x128xf32>
    %196 = arith.addf %194, %195 : vector<8x128xf32>
    %197 = vector.extract_strided_slice %7 {offsets = [6, 0, 0], sizes = [1, 8, 384], strides = [1, 1, 1]} : vector<8x8x384xf32> to vector<1x8x384xf32>
    %198 = vector.shape_cast %197 : vector<1x8x384xf32> to vector<8x384xf32>
    %cst_35 = arith.constant dense<0.000000e+00> : vector<8x384xf32>
    %199 = tpu.matmul %196, %8, %cst_35 {dimension_numbers = #tpu.dot_dimension_numbers<[1], [0], [0], [1], [0, 0, 1, 1], [], []>} : vector<8x128xf32>, vector<128x384xf32>, vector<8x384xf32> -> vector<8x384xf32>
    %200 = vector.extract_strided_slice %198 {offsets = [0, 0], sizes = [8, 128], strides = [1, 1]} : vector<8x384xf32> to vector<8x128xf32>
    %201 = vector.extract_strided_slice %199 {offsets = [0, 0], sizes = [8, 128], strides = [1, 1]} : vector<8x384xf32> to vector<8x128xf32>
    %202 = arith.addf %200, %201 : vector<8x128xf32>
    %203 = arith.negf %202 : vector<8x128xf32>
    %204 = math.exp %203 : vector<8x128xf32>
    %cst_36 = arith.constant 1.000000e+00 : f32
    %205 = vector.broadcast %cst_36 : f32 to vector<8x128xf32>
    %206 = arith.addf %205, %204 : vector<8x128xf32>
    %207 = arith.divf %205, %206 : vector<8x128xf32>
    %208 = vector.extract_strided_slice %198 {offsets = [0, 128], sizes = [8, 128], strides = [1, 1]} : vector<8x384xf32> to vector<8x128xf32>
    %209 = vector.extract_strided_slice %199 {offsets = [0, 128], sizes = [8, 128], strides = [1, 1]} : vector<8x384xf32> to vector<8x128xf32>
    %210 = arith.addf %208, %209 : vector<8x128xf32>
    %211 = arith.negf %210 : vector<8x128xf32>
    %212 = math.exp %211 : vector<8x128xf32>
    %cst_37 = arith.constant 1.000000e+00 : f32
    %213 = vector.broadcast %cst_37 : f32 to vector<8x128xf32>
    %214 = arith.addf %213, %212 : vector<8x128xf32>
    %215 = arith.divf %213, %214 : vector<8x128xf32>
    %216 = vector.extract_strided_slice %198 {offsets = [0, 256], sizes = [8, 128], strides = [1, 1]} : vector<8x384xf32> to vector<8x128xf32>
    %217 = vector.extract_strided_slice %199 {offsets = [0, 256], sizes = [8, 128], strides = [1, 1]} : vector<8x384xf32> to vector<8x128xf32>
    %218 = vector.broadcast %9 : vector<1x128xf32> to vector<8x128xf32>
    %219 = arith.addf %217, %218 : vector<8x128xf32>
    %220 = arith.mulf %207, %219 : vector<8x128xf32>
    %221 = arith.addf %216, %220 : vector<8x128xf32>
    %222 = math.tanh %221 : vector<8x128xf32>
    %cst_38 = arith.constant 1.000000e+00 : f32
    %223 = vector.broadcast %cst_38 : f32 to vector<8x128xf32>
    %224 = arith.subf %223, %215 : vector<8x128xf32>
    %225 = arith.mulf %224, %222 : vector<8x128xf32>
    %226 = arith.mulf %215, %196 : vector<8x128xf32>
    %227 = arith.addf %225, %226 : vector<8x128xf32>
    %228 = vector.extract_strided_slice %7 {offsets = [7, 0, 0], sizes = [1, 8, 384], strides = [1, 1, 1]} : vector<8x8x384xf32> to vector<1x8x384xf32>
    %229 = vector.shape_cast %228 : vector<1x8x384xf32> to vector<8x384xf32>
    %cst_39 = arith.constant dense<0.000000e+00> : vector<8x384xf32>
    %230 = tpu.matmul %227, %8, %cst_39 {dimension_numbers = #tpu.dot_dimension_numbers<[1], [0], [0], [1], [0, 0, 1, 1], [], []>} : vector<8x128xf32>, vector<128x384xf32>, vector<8x384xf32> -> vector<8x384xf32>
    %231 = vector.extract_strided_slice %229 {offsets = [0, 0], sizes = [8, 128], strides = [1, 1]} : vector<8x384xf32> to vector<8x128xf32>
    %232 = vector.extract_strided_slice %230 {offsets = [0, 0], sizes = [8, 128], strides = [1, 1]} : vector<8x384xf32> to vector<8x128xf32>
    %233 = arith.addf %231, %232 : vector<8x128xf32>
    %234 = arith.negf %233 : vector<8x128xf32>
    %235 = math.exp %234 : vector<8x128xf32>
    %cst_40 = arith.constant 1.000000e+00 : f32
    %236 = vector.broadcast %cst_40 : f32 to vector<8x128xf32>
    %237 = arith.addf %236, %235 : vector<8x128xf32>
    %238 = arith.divf %236, %237 : vector<8x128xf32>
    %239 = vector.extract_strided_slice %229 {offsets = [0, 128], sizes = [8, 128], strides = [1, 1]} : vector<8x384xf32> to vector<8x128xf32>
    %240 = vector.extract_strided_slice %230 {offsets = [0, 128], sizes = [8, 128], strides = [1, 1]} : vector<8x384xf32> to vector<8x128xf32>
    %241 = arith.addf %239, %240 : vector<8x128xf32>
    %242 = arith.negf %241 : vector<8x128xf32>
    %243 = math.exp %242 : vector<8x128xf32>
    %cst_41 = arith.constant 1.000000e+00 : f32
    %244 = vector.broadcast %cst_41 : f32 to vector<8x128xf32>
    %245 = arith.addf %244, %243 : vector<8x128xf32>
    %246 = arith.divf %244, %245 : vector<8x128xf32>
    %247 = vector.extract_strided_slice %229 {offsets = [0, 256], sizes = [8, 128], strides = [1, 1]} : vector<8x384xf32> to vector<8x128xf32>
    %248 = vector.extract_strided_slice %230 {offsets = [0, 256], sizes = [8, 128], strides = [1, 1]} : vector<8x384xf32> to vector<8x128xf32>
    %249 = vector.broadcast %9 : vector<1x128xf32> to vector<8x128xf32>
    %250 = arith.addf %248, %249 : vector<8x128xf32>
    %251 = arith.mulf %238, %250 : vector<8x128xf32>
    %252 = arith.addf %247, %251 : vector<8x128xf32>
    %253 = math.tanh %252 : vector<8x128xf32>
    %cst_42 = arith.constant 1.000000e+00 : f32
    %254 = vector.broadcast %cst_42 : f32 to vector<8x128xf32>
    %255 = arith.subf %254, %246 : vector<8x128xf32>
    %256 = arith.mulf %255, %253 : vector<8x128xf32>
    %257 = arith.mulf %246, %227 : vector<8x128xf32>
    %258 = arith.addf %256, %257 : vector<8x128xf32>
    %c0_43 = arith.constant 0 : index
    %c0_44 = arith.constant 0 : index
    %259 = vector.load %arg6[%c0_43, %c0_44] : memref<128x50xf32, #tpu.memory_space<vmem>>, vector<128x50xf32>
    %cst_45 = arith.constant dense<0.000000e+00> : vector<8x50xf32>
    %260 = tpu.matmul %258, %259, %cst_45 {dimension_numbers = #tpu.dot_dimension_numbers<[1], [0], [0], [1], [0, 0, 1, 1], [], []>} : vector<8x128xf32>, vector<128x50xf32>, vector<8x50xf32> -> vector<8x50xf32>
    %c0_46 = arith.constant 0 : index
    %c0_47 = arith.constant 0 : index
    %261 = vector.load %arg7[%c0_46, %c0_47] : memref<1x50xf32, #tpu.memory_space<vmem>>, vector<1x50xf32>
    %262 = vector.broadcast %261 : vector<1x50xf32> to vector<8x50xf32>
    %263 = arith.addf %260, %262 : vector<8x50xf32>
    %264 = math.tanh %263 : vector<8x50xf32>
    %c0_48 = arith.constant 0 : index
    %c0_49 = arith.constant 0 : index
    %265 = vector.load %arg8[%c0_48, %c0_49] : memref<50x128xf32, #tpu.memory_space<vmem>>, vector<50x128xf32>
    %cst_50 = arith.constant dense<0.000000e+00> : vector<8x128xf32>
    %266 = tpu.matmul %264, %265, %cst_50 {dimension_numbers = #tpu.dot_dimension_numbers<[1], [0], [0], [1], [0, 0, 1, 1], [], []>} : vector<8x50xf32>, vector<50x128xf32>, vector<8x128xf32> -> vector<8x128xf32>
    %c0_51 = arith.constant 0 : index
    %c0_52 = arith.constant 0 : index
    %267 = vector.load %arg9[%c0_51, %c0_52] : memref<1x128xf32, #tpu.memory_space<vmem>>, vector<1x128xf32>
    %268 = vector.broadcast %267 : vector<1x128xf32> to vector<8x128xf32>
    %269 = arith.addf %266, %268 : vector<8x128xf32>
    %c0_53 = arith.constant 0 : index
    %c0_54 = arith.constant 0 : index
    %270 = vector.load %arg10[%c0_53, %c0_54] : memref<8x128xf32, #tpu.memory_space<vmem>>, vector<8x128xf32>
    tpu.vector_store %arg10[%c0_53, %c0_54], %269 {strides = array<i32>} : memref<8x128xf32, #tpu.memory_space<vmem>>, vector<8x128xf32>,
    return
  }
  func.func @transform_0(%arg0: i32) -> (i32, i32, i32) {
    %c0_i32 = arith.constant 0 : i32
    %c0_i32_0 = arith.constant 0 : i32
    %c0_i32_1 = arith.constant 0 : i32
    return %c0_i32, %arg0, %c0_i32_0 : i32, i32, i32
  }
  func.func @transform_1(%arg0: i32) -> (i32, i32) {
    %c0_i32 = arith.constant 0 : i32
    %c0_i32_0 = arith.constant 0 : i32
    %c0_i32_1 = arith.constant 0 : i32
    return %c0_i32, %c0_i32_0 : i32, i32
  }
  func.func @transform_2(%arg0: i32) -> (i32, i32) {
    %c0_i32 = arith.constant 0 : i32
    %c0_i32_0 = arith.constant 0 : i32
    %c0_i32_1 = arith.constant 0 : i32
    return %c0_i32, %c0_i32_0 : i32, i32
  }
  func.func @transform_3(%arg0: i32) -> (i32, i32) {
    %c0_i32 = arith.constant 0 : i32
    %c0_i32_0 = arith.constant 0 : i32
    %c0_i32_1 = arith.constant 0 : i32
    return %c0_i32, %c0_i32_0 : i32, i32
  }
  func.func @transform_4(%arg0: i32) -> (i32, i32) {
    %c0_i32 = arith.constant 0 : i32
    %c0_i32_0 = arith.constant 0 : i32
    %c0_i32_1 = arith.constant 0 : i32
    return %c0_i32, %c0_i32_0 : i32, i32
  }
  func.func @transform_5(%arg0: i32) -> (i32, i32) {
    %c0_i32 = arith.constant 0 : i32
    %c0_i32_0 = arith.constant 0 : i32
    %c0_i32_1 = arith.constant 0 : i32
    return %c0_i32, %c0_i32_0 : i32, i32
  }
  func.func @transform_6(%arg0: i32) -> (i32, i32) {
    %c0_i32 = arith.constant 0 : i32
    %c0_i32_0 = arith.constant 0 : i32
    %c0_i32_1 = arith.constant 0 : i32
    return %c0_i32, %c0_i32_0 : i32, i32
  }
  func.func @transform_7(%arg0: i32) -> (i32, i32) {
    %c0_i32 = arith.constant 0 : i32
    %c0_i32_0 = arith.constant 0 : i32
    %c0_i32_1 = arith.constant 0 : i32
    return %c0_i32, %c0_i32_0 : i32, i32
  }
  func.func @transform_8(%arg0: i32) -> (i32, i32) {
    %c0_i32 = arith.constant 0 : i32
    %c0_i32_0 = arith.constant 0 : i32
    %c0_i32_1 = arith.constant 0 : i32
    return %c0_i32, %c0_i32_0 : i32, i32
  }
  func.func @transform_9(%arg0: i32) -> (i32, i32) {
    %c0_i32 = arith.constant 0 : i32
    %c0_i32_0 = arith.constant 0 : i32
    return %arg0, %c0_i32 : i32, i32
  }
}

</mosaic_0001>

<llo_original>
// kernel: encoder_z0_rnn_forward.1
$region0: #{encoder_z0_rnn_forward.1}
  #allocation0 [shape = 'u32[]', space=smem, size = 0x4, offset = 0x4, fixed_abs, tag = 'smem constant byte address 0x4 - core index']
  #allocation1 [shape = 'u32[144,128]{1,0:T(1,128)}', space=vmem, size = 0x12000, scoped, tag = 'internal scratch']
  %s0 = inlined_call_operand.vmem [shape: f32[8,8,5], index: 0, kind: input, shape index: {}]
  %s1 = inlined_call_operand.vmem [shape: f32[5,384], index: 1, kind: input, shape index: {}]
  %s2 = inlined_call_operand.vmem [shape: f32[1,384], index: 2, kind: input, shape index: {}]
  %s3 = inlined_call_operand.vmem [shape: f32[128,384], index: 3, kind: input, shape index: {}]
  %s4 = inlined_call_operand.vmem [shape: f32[1,128], index: 4, kind: input, shape index: {}]
  %s5 = inlined_call_operand.vmem [shape: f32[128,50], index: 5, kind: input, shape index: {}]
  %s6 = inlined_call_operand.vmem [shape: f32[1,50], index: 6, kind: input, shape index: {}]
  %s7 = inlined_call_operand.vmem [shape: f32[50,128], index: 7, kind: input, shape index: {}]
  %s8 = inlined_call_operand.vmem [shape: f32[1,128], index: 8, kind: input, shape index: {}]
  %s9 = inlined_call_operand.vmem [shape: f32[8,128], index: 9, kind: output, shape index: {}]
  %s10 = sld [smem:[#allocation0]]
  $region46: #{encoder_z0_rnn_forward.1} parent=0
    _
  %s12 = ssub.s32 1, %s10
  %s13 = scalar_select 0, %s12, %s10
  // Predicated region
  $region2: #{encoder_z0_rnn_forward.1} parent=0 // pred_check
    _
  $region3: #{encoder_z0_rnn_forward.1} parent=0 // pred_check_branch
    %15 = sbr.rel (0) target = $region5
  $region4: #{encoder_z0_rnn_forward.1} parent=0 // pred_region
    _
  $region5: #{encoder_z0_rnn_forward.1} parent=0 // pred_fallthru
    _
  // Predicated region
  $region6: #{encoder_z0_rnn_forward.1} parent=0 // pred_check
    _
  $region7: #{encoder_z0_rnn_forward.1} parent=0 // pred_check_branch
    %17 = sbr.rel (0) target = $region9
  $region8: #{encoder_z0_rnn_forward.1} parent=0 // pred_region
    _
  $region9: #{encoder_z0_rnn_forward.1} parent=0 // pred_fallthru
    _
  // Predicated region
  $region10: #{encoder_z0_rnn_forward.1} parent=0 // pred_check
    _
  $region11: #{encoder_z0_rnn_forward.1} parent=0 // pred_check_branch
    %19 = sbr.rel (0) target = $region13
  $region12: #{encoder_z0_rnn_forward.1} parent=0 // pred_region
    _
  $region13: #{encoder_z0_rnn_forward.1} parent=0 // pred_fallthru
    _
  // Predicated region
  $region14: #{encoder_z0_rnn_forward.1} parent=0 // pred_check
    _
  $region15: #{encoder_z0_rnn_forward.1} parent=0 // pred_check_branch
    %21 = sbr.rel (0) target = $region17
  $region16: #{encoder_z0_rnn_forward.1} parent=0 // pred_region
    _
  $region17: #{encoder_z0_rnn_forward.1} parent=0 // pred_fallthru
    _
  // Predicated region
  $region18: #{encoder_z0_rnn_forward.1} parent=0 // pred_check
    _
  $region19: #{encoder_z0_rnn_forward.1} parent=0 // pred_check_branch
    %23 = sbr.rel (0) target = $region21
  $region20: #{encoder_z0_rnn_forward.1} parent=0 // pred_region
    _
  $region21: #{encoder_z0_rnn_forward.1} parent=0 // pred_fallthru
    _
  // Predicated region
  $region22: #{encoder_z0_rnn_forward.1} parent=0 // pred_check
    _
  $region23: #{encoder_z0_rnn_forward.1} parent=0 // pred_check_branch
    %25 = sbr.rel (0) target = $region25
  $region24: #{encoder_z0_rnn_forward.1} parent=0 // pred_region
    _
  $region25: #{encoder_z0_rnn_forward.1} parent=0 // pred_fallthru
    _
  // Predicated region
  $region26: #{encoder_z0_rnn_forward.1} parent=0 // pred_check
    _
  $region27: #{encoder_z0_rnn_forward.1} parent=0 // pred_check_branch
    %27 = sbr.rel (0) target = $region29
  $region28: #{encoder_z0_rnn_forward.1} parent=0 // pred_region
    _
  $region29: #{encoder_z0_rnn_forward.1} parent=0 // pred_fallthru
    _
  // Predicated region
  $region30: #{encoder_z0_rnn_forward.1} parent=0 // pred_check
    _
  $region31: #{encoder_z0_rnn_forward.1} parent=0 // pred_check_branch
    %29 = sbr.rel (0) target = $region33
  $region32: #{encoder_z0_rnn_forward.1} parent=0 // pred_region
    _
  $region33: #{encoder_z0_rnn_forward.1} parent=0 // pred_fallthru
    _
  // Predicated region
  $region34: #{encoder_z0_rnn_forward.1} parent=0 // pred_check
    _
  $region35: #{encoder_z0_rnn_forward.1} parent=0 // pred_check_branch
    %31 = sbr.rel (0) target = $region37
  $region36: #{encoder_z0_rnn_forward.1} parent=0 // pred_region
    _
  $region37: #{encoder_z0_rnn_forward.1} parent=0 // pred_fallthru
    _
  %v32 = vld [vmem:[%s0] sm:$0xff]
  %v33 = vld [vmem:[%s0 + $0x8] sm:$0xff]
  %v34 = vld [vmem:[%s0 + $0x10] sm:$0xff]
  %v35 = vld [vmem:[%s0 + $0x18] sm:$0xff]
  %v36 = vld [vmem:[%s0 + $0x20] sm:$0xff]
  %v37 = vld [vmem:[%s0 + $0x28] sm:$0xff]
  %v38 = vld [vmem:[%s0 + $0x30] sm:$0xff]
  %v39 = vld [vmem:[%s0 + $0x38] sm:$0xff]
  %v40 = vld [vmem:[%s1] sm:$0x1f]
  %v41 = vld [vmem:[%s1 + $0x8] sm:$0x1f]
  %v42 = vld [vmem:[%s1 + $0x10] sm:$0x1f]
  %v43 = vld [vmem:[%s2] sm:$0x7]
  %v45 = vlaneseq
  %v46 = vshrl.u32 %v45, 7
  %v47 = vsub.s32 0, %v46
  %v48 = vrot.slane %v43, %v47
  %v49 = vlaneseq
  %v50 = vshrl.u32 %v49, 7
  %v51 = vsub.s32 1, %v50
  %v52 = vrot.slane %v43, %v51
  %v53 = vlaneseq
  %v54 = vshrl.u32 %v53, 7
  %v55 = vsub.s32 2, %v54
  %v56 = vrot.slane %v43, %v55
  %vm60 = vcmask 39936
  %v62 = vsel %vm60, %v32, 0
  %v65 = vsel %vm60, %v33, 0
  %v68 = vsel %vm60, %v34, 0
  %v71 = vsel %vm60, %v35, 0
  %v74 = vsel %vm60, %v36, 0
  %v77 = vsel %vm60, %v37, 0
  %v80 = vsel %vm60, %v38, 0
  %v83 = vsel %vm60, %v39, 0
  %vm85 = vcmask 1044480
  %v87 = vsel %vm85, %v40, 0
  %v90 = vsel %vm85, %v41, 0
  %v93 = vsel %vm85, %v42, 0
  %95 = vmatprep.subr.mxu0 %v90
  %96 = vmatpush1.msra.mxu0 %v87
  %97 = vmatprep.subr.mxu0 0.0
  %98 = vmatpush1.msra.mxu0 0.0
  %99 = vmatprep.subr.mxu0 0.0
  %100 = vmatpush1.msra.mxu0 0.0
  %101 = vmatprep.subr.mxu0 0.0
  %102 = vmatpush1.msra.mxu0 0.0
  %103 = vmatprep.subr.mxu0 0.0
  %104 = vmatpush1.msra.mxu0 0.0
  %105 = vmatprep.subr.mxu0 0.0
  %106 = vmatpush1.msra.mxu0 0.0
  %107 = vmatprep.subr.mxu0 0.0
  %108 = vmatpush1.msra.mxu0 0.0
  %109 = vmatprep.subr.mxu0 0.0
  %110 = vmatpush1.msra.mxu0 0.0
  %111 = vmatprep.subr.mxu0 0.0
  %112 = vmatpush1.msra.mxu0 0.0
  %113 = vmatprep.subr.mxu0 0.0
  %114 = vmatpush1.msra.mxu0 0.0
  %115 = vmatprep.subr.mxu0 0.0
  %116 = vmatpush1.msra.mxu0 0.0
  %117 = vmatprep.subr.mxu0 0.0
  %118 = vmatpush1.msra.mxu0 0.0
  %119 = vmatprep.subr.mxu0 0.0
  %120 = vmatpush1.msra.mxu0 0.0
  %121 = vmatprep.subr.mxu0 0.0
  %122 = vmatpush1.msra.mxu0 0.0
  %123 = vmatprep.subr.mxu0 0.0
  %124 = vmatpush1.msra.mxu0 0.0
  %125 = vmatprep.subr.mxu0 0.0
  %126 = vmatpush1.msra.mxu0 0.0
  %127 = vmatprep.subr.mxu0 0.0
  %128 = vmatpush1.msra.mxu0 0.0
  %129 = vmatprep.subr.mxu0 0.0
  %130 = vmatpush1.msra.mxu0 0.0
  %131 = vmatprep.subr.mxu0 0.0
  %132 = vmatpush1.msra.mxu0 0.0
  %133 = vmatprep.subr.mxu0 0.0
  %134 = vmatpush1.msra.mxu0 0.0
  %135 = vmatprep.subr.mxu0 0.0
  %136 = vmatpush1.msra.mxu0 0.0
  %137 = vmatprep.subr.mxu0 0.0
  %138 = vmatpush1.msra.mxu0 0.0
  %139 = vmatprep.subr.mxu0 0.0
  %140 = vmatpush1.msra.mxu0 0.0
  %141 = vmatprep.subr.mxu0 0.0
  %142 = vmatpush1.msra.mxu0 0.0
  %143 = vmatprep.subr.mxu0 0.0
  %144 = vmatpush1.msra.mxu0 0.0
  %145 = vmatprep.subr.mxu0 0.0
  %146 = vmatpush1.msra.mxu0 0.0
  %147 = vmatprep.subr.mxu0 0.0
  %148 = vmatpush1.msra.mxu0 0.0
  %149 = vmatprep.subr.mxu0 0.0
  %150 = vmatpush1.msra.mxu0 0.0
  %151 = vmatprep.subr.mxu0 0.0
  %152 = vmatpush1.msra.mxu0 0.0
  %153 = vmatprep.subr.mxu0 0.0
  %154 = vmatpush1.msra.mxu0 0.0
  %155 = vmatprep.subr.mxu0 0.0
  %156 = vmatpush1.msra.mxu0 0.0
  %157 = vmatprep.subr.mxu0 0.0
  %158 = vmatpush1.msra.mxu0 0.0
  %159 = vmatprep.mubr.f32.mxu0 0.0
  %160 = vmatmul.mubr.f32.gmra.mrb[0].mxu0 %v62
  %v161 = vpop.f32.mrb[0].mxu0
  %v162 = vadd.f32 %v48, %v161
  %v163 = vpop.f32.mrb[0].mxu0
  %v164 = vadd.f32 %v52, %v163
  %165 = vmatprep.mubr.f32.mxu0 0.0
  %166 = vmatmul.mubr.f32.gmra.mrb[0].mxu0 %v65
  %v167 = vpop.f32.mrb[0].mxu0
  %v168 = vadd.f32 %v48, %v167
  %v169 = vpop.f32.mrb[0].mxu0
  %v170 = vadd.f32 %v52, %v169
  %171 = vmatprep.mubr.f32.mxu0 0.0
  %172 = vmatmul.mubr.f32.gmra.mrb[0].mxu0 %v68
  %v173 = vpop.f32.mrb[0].mxu0
  %v174 = vadd.f32 %v48, %v173
  %v175 = vpop.f32.mrb[0].mxu0
  %v176 = vadd.f32 %v52, %v175
  %177 = vmatprep.mubr.f32.mxu0 0.0
  %178 = vmatmul.mubr.f32.gmra.mrb[0].mxu0 %v71
  %v179 = vpop.f32.mrb[0].mxu0
  %v180 = vadd.f32 %v48, %v179
  %v181 = vpop.f32.mrb[0].mxu0
  %v182 = vadd.f32 %v52, %v181
  %183 = vmatprep.mubr.f32.mxu0 0.0
  %184 = vmatmul.mubr.f32.gmra.mrb[0].mxu0 %v74
  %v185 = vpop.f32.mrb[0].mxu0
  %v186 = vadd.f32 %v48, %v185
  %v187 = vpop.f32.mrb[0].mxu0
  %v188 = vadd.f32 %v52, %v187
  %189 = vmatprep.mubr.f32.mxu0 0.0
  %190 = vmatmul.mubr.f32.gmra.mrb[0].mxu0 %v77
  %v191 = vpop.f32.mrb[0].mxu0
  %v192 = vadd.f32 %v48, %v191
  %v193 = vpop.f32.mrb[0].mxu0
  %v194 = vadd.f32 %v52, %v193
  %195 = vmatprep.mubr.f32.mxu0 0.0
  %196 = vmatmul.mubr.f32.gmra.mrb[0].mxu0 %v80
  %v197 = vpop.f32.mrb[0].mxu0
  %v198 = vadd.f32 %v48, %v197
  %v199 = vpop.f32.mrb[0].mxu0
  %v200 = vadd.f32 %v52, %v199
  %201 = vmatprep.mubr.f32.mxu0 0.0
  %202 = vmatmul.mubr.f32.gmra.mrb[0].mxu0 %v83
  %v203 = vpop.f32.mrb[0].mxu0
  %v204 = vadd.f32 %v48, %v203
  %v205 = vpop.f32.mrb[0].mxu0
  %v206 = vadd.f32 %v52, %v205
  %207 = vdwg.mxu0
  %208 = vmatprep.subr.mxu0 0.0
  %209 = vmatpush1.msra.mxu0 %v93
  %210 = vmatprep.subr.mxu0 0.0
  %211 = vmatpush1.msra.mxu0 0.0
  %212 = vmatprep.subr.mxu0 0.0
  %213 = vmatpush1.msra.mxu0 0.0
  %214 = vmatprep.subr.mxu0 0.0
  %215 = vmatpush1.msra.mxu0 0.0
  %216 = vmatprep.subr.mxu0 0.0
  %217 = vmatpush1.msra.mxu0 0.0
  %218 = vmatprep.subr.mxu0 0.0
  %219 = vmatpush1.msra.mxu0 0.0
  %220 = vmatprep.subr.mxu0 0.0
  %221 = vmatpush1.msra.mxu0 0.0
  %222 = vmatprep.subr.mxu0 0.0
  %223 = vmatpush1.msra.mxu0 0.0
  %224 = vmatprep.subr.mxu0 0.0
  %225 = vmatpush1.msra.mxu0 0.0
  %226 = vmatprep.subr.mxu0 0.0
  %227 = vmatpush1.msra.mxu0 0.0
  %228 = vmatprep.subr.mxu0 0.0
  %229 = vmatpush1.msra.mxu0 0.0
  %230 = vmatprep.subr.mxu0 0.0
  %231 = vmatpush1.msra.mxu0 0.0
  %232 = vmatprep.subr.mxu0 0.0
  %233 = vmatpush1.msra.mxu0 0.0
  %234 = vmatprep.subr.mxu0 0.0
  %235 = vmatpush1.msra.mxu0 0.0
  %236 = vmatprep.subr.mxu0 0.0
  %237 = vmatpush1.msra.mxu0 0.0
  %238 = vmatprep.subr.mxu0 0.0
  %239 = vmatpush1.msra.mxu0 0.0
  %240 = vmatprep.subr.mxu0 0.0
  %241 = vmatpush1.msra.mxu0 0.0
  %242 = vmatprep.subr.mxu0 0.0
  %243 = vmatpush1.msra.mxu0 0.0
  %244 = vmatprep.subr.mxu0 0.0
  %245 = vmatpush1.msra.mxu0 0.0
  %246 = vmatprep.subr.mxu0 0.0
  %247 = vmatpush1.msra.mxu0 0.0
  %248 = vmatprep.subr.mxu0 0.0
  %249 = vmatpush1.msra.mxu0 0.0
  %250 = vmatprep.subr.mxu0 0.0
  %251 = vmatpush1.msra.mxu0 0.0
  %252 = vmatprep.subr.mxu0 0.0
  %253 = vmatpush1.msra.mxu0 0.0
  %254 = vmatprep.subr.mxu0 0.0
  %255 = vmatpush1.msra.mxu0 0.0
  %256 = vmatprep.subr.mxu0 0.0
  %257 = vmatpush1.msra.mxu0 0.0
  %258 = vmatprep.subr.mxu0 0.0
  %259 = vmatpush1.msra.mxu0 0.0
  %260 = vmatprep.subr.mxu0 0.0
  %261 = vmatpush1.msra.mxu0 0.0
  %262 = vmatprep.subr.mxu0 0.0
  %263 = vmatpush1.msra.mxu0 0.0
  %264 = vmatprep.subr.mxu0 0.0
  %265 = vmatpush1.msra.mxu0 0.0
  %266 = vmatprep.subr.mxu0 0.0
  %267 = vmatpush1.msra.mxu0 0.0
  %268 = vmatprep.subr.mxu0 0.0
  %269 = vmatpush1.msra.mxu0 0.0
  %270 = vmatprep.subr.mxu0 0.0
  %271 = vmatpush1.msra.mxu0 0.0
  %272 = vmatprep.mubr.f32.mxu0 0.0
  %273 = vmatmul.mubr.f32.gmra.mrb[0].mxu0 %v62
  %v274 = vpop.f32.mrb[0].mxu0
  %v275 = vadd.f32 %v56, %v274
  %v276 = vpop.f32.mrb[0].mxu0
  %277 = vmatprep.mubr.f32.mxu0 0.0
  %278 = vmatmul.mubr.f32.gmra.mrb[0].mxu0 %v65
  %v279 = vpop.f32.mrb[0].mxu0
  %v280 = vadd.f32 %v56, %v279
  %v281 = vpop.f32.mrb[0].mxu0
  %282 = vmatprep.mubr.f32.mxu0 0.0
  %283 = vmatmul.mubr.f32.gmra.mrb[0].mxu0 %v68
  %v284 = vpop.f32.mrb[0].mxu0
  %v285 = vadd.f32 %v56, %v284
  %v286 = vpop.f32.mrb[0].mxu0
  %287 = vmatprep.mubr.f32.mxu0 0.0
  %288 = vmatmul.mubr.f32.gmra.mrb[0].mxu0 %v71
  %v289 = vpop.f32.mrb[0].mxu0
  %v290 = vadd.f32 %v56, %v289
  %v291 = vpop.f32.mrb[0].mxu0
  %292 = vmatprep.mubr.f32.mxu0 0.0
  %293 = vmatmul.mubr.f32.gmra.mrb[0].mxu0 %v74
  %v294 = vpop.f32.mrb[0].mxu0
  %v295 = vadd.f32 %v56, %v294
  %v296 = vpop.f32.mrb[0].mxu0
  %297 = vmatprep.mubr.f32.mxu0 0.0
  %298 = vmatmul.mubr.f32.gmra.mrb[0].mxu0 %v77
  %v299 = vpop.f32.mrb[0].mxu0
  %v300 = vadd.f32 %v56, %v299
  %v301 = vpop.f32.mrb[0].mxu0
  %302 = vmatprep.mubr.f32.mxu0 0.0
  %303 = vmatmul.mubr.f32.gmra.mrb[0].mxu0 %v80
  %v304 = vpop.f32.mrb[0].mxu0
  %v305 = vadd.f32 %v56, %v304
  %v306 = vpop.f32.mrb[0].mxu0
  %307 = vmatprep.mubr.f32.mxu0 0.0
  %308 = vmatmul.mubr.f32.gmra.mrb[0].mxu0 %v83
  %v309 = vpop.f32.mrb[0].mxu0
  %v310 = vadd.f32 %v56, %v309
  %v311 = vpop.f32.mrb[0].mxu0
  %312 = vdwg.mxu0
  %v313 = vld [vmem:[%s3] sm:$0xff]
  %v314 = vld [vmem:[%s3 + $0x8] sm:$0xff]
  %v315 = vld [vmem:[%s3 + $0x10] sm:$0xff]
  %v316 = vld [vmem:[%s3 + $0x18] sm:$0xff]
  %v317 = vld [vmem:[%s3 + $0x20] sm:$0xff]
  %v318 = vld [vmem:[%s3 + $0x28] sm:$0xff]
  %v319 = vld [vmem:[%s3 + $0x30] sm:$0xff]
  %v320 = vld [vmem:[%s3 + $0x38] sm:$0xff]
  %v321 = vld [vmem:[%s3 + $0x40] sm:$0xff]
  %v322 = vld [vmem:[%s3 + $0x48] sm:$0xff]
  %v323 = vld [vmem:[%s3 + $0x50] sm:$0xff]
  %v324 = vld [vmem:[%s3 + $0x58] sm:$0xff]
  %v325 = vld [vmem:[%s3 + $0x60] sm:$0xff]
  %v326 = vld [vmem:[%s3 + $0x68] sm:$0xff]
  %v327 = vld [vmem:[%s3 + $0x70] sm:$0xff]
  %v328 = vld [vmem:[%s3 + $0x78] sm:$0xff]
  %v329 = vld [vmem:[%s3 + $0x80] sm:$0xff]
  %v330 = vld [vmem:[%s3 + $0x88] sm:$0xff]
  %v331 = vld [vmem:[%s3 + $0x90] sm:$0xff]
  %v332 = vld [vmem:[%s3 + $0x98] sm:$0xff]
  %v333 = vld [vmem:[%s3 + $0xa0] sm:$0xff]
  %v334 = vld [vmem:[%s3 + $0xa8] sm:$0xff]
  %v335 = vld [vmem:[%s3 + $0xb0] sm:$0xff]
  %v336 = vld [vmem:[%s3 + $0xb8] sm:$0xff]
  %v337 = vld [vmem:[%s3 + $0xc0] sm:$0xff]
  %v338 = vld [vmem:[%s3 + $0xc8] sm:$0xff]
  %v339 = vld [vmem:[%s3 + $0xd0] sm:$0xff]
  %v340 = vld [vmem:[%s3 + $0xd8] sm:$0xff]
  %v341 = vld [vmem:[%s3 + $0xe0] sm:$0xff]
  %v342 = vld [vmem:[%s3 + $0xe8] sm:$0xff]
  %v343 = vld [vmem:[%s3 + $0xf0] sm:$0xff]
  %v344 = vld [vmem:[%s3 + $0xf8] sm:$0xff]
  %v345 = vld [vmem:[%s3 + $0x100] sm:$0xff]
  %v346 = vld [vmem:[%s3 + $0x108] sm:$0xff]
  %v347 = vld [vmem:[%s3 + $0x110] sm:$0xff]
  %v348 = vld [vmem:[%s3 + $0x118] sm:$0xff]
  %v349 = vld [vmem:[%s3 + $0x120] sm:$0xff]
  %v350 = vld [vmem:[%s3 + $0x128] sm:$0xff]
  %v351 = vld [vmem:[%s3 + $0x130] sm:$0xff]
  %v352 = vld [vmem:[%s3 + $0x138] sm:$0xff]
  %v353 = vld [vmem:[%s3 + $0x140] sm:$0xff]
  %v354 = vld [vmem:[%s3 + $0x148] sm:$0xff]
  %v355 = vld [vmem:[%s3 + $0x150] sm:$0xff]
  %v356 = vld [vmem:[%s3 + $0x158] sm:$0xff]
  %v357 = vld [vmem:[%s3 + $0x160] sm:$0xff]
  %v358 = vld [vmem:[%s3 + $0x168] sm:$0xff]
  %v359 = vld [vmem:[%s3 + $0x170] sm:$0xff]
  %v360 = vld [vmem:[%s3 + $0x178] sm:$0xff]
  %v361 = vld [vmem:[%s4] sm:$0x1]
  %362 = vmatprep.subr.mxu0 %v314
  %363 = vmatpush1.msra.mxu0 %v313
  %364 = vmatprep.subr.mxu0 %v317
  %365 = vmatpush1.msra.mxu0 %v316
  %366 = vmatprep.subr.mxu0 %v320
  %367 = vmatpush1.msra.mxu0 %v319
  %368 = vmatprep.subr.mxu0 %v323
  %369 = vmatpush1.msra.mxu0 %v322
  %370 = vmatprep.subr.mxu0 %v326
  %371 = vmatpush1.msra.mxu0 %v325
  %372 = vmatprep.subr.mxu0 %v329
  %373 = vmatpush1.msra.mxu0 %v328
  %374 = vmatprep.subr.mxu0 %v332
  %375 = vmatpush1.msra.mxu0 %v331
  %376 = vmatprep.subr.mxu0 %v335
  %377 = vmatpush1.msra.mxu0 %v334
  %378 = vmatprep.subr.mxu0 %v338
  %379 = vmatpush1.msra.mxu0 %v337
  %380 = vmatprep.subr.mxu0 %v341
  %381 = vmatpush1.msra.mxu0 %v340
  %382 = vmatprep.subr.mxu0 %v344
  %383 = vmatpush1.msra.mxu0 %v343
  %384 = vmatprep.subr.mxu0 %v347
  %385 = vmatpush1.msra.mxu0 %v346
  %386 = vmatprep.subr.mxu0 %v350
  %387 = vmatpush1.msra.mxu0 %v349
  %388 = vmatprep.subr.mxu0 %v353
  %389 = vmatpush1.msra.mxu0 %v352
  %390 = vmatprep.subr.mxu0 %v356
  %391 = vmatpush1.msra.mxu0 %v355
  %392 = vmatprep.subr.mxu0 %v359
  %393 = vmatpush1.msra.mxu0 %v358
  %394 = vmatprep.subr.mxu0 0.0
  %395 = vmatpush1.msra.mxu0 0.0
  %396 = vmatprep.subr.mxu0 0.0
  %397 = vmatpush1.msra.mxu0 0.0
  %398 = vmatprep.subr.mxu0 0.0
  %399 = vmatpush1.msra.mxu0 0.0
  %400 = vmatprep.subr.mxu0 0.0
  %401 = vmatpush1.msra.mxu0 0.0
  %402 = vmatprep.subr.mxu0 0.0
  %403 = vmatpush1.msra.mxu0 0.0
  %404 = vmatprep.subr.mxu0 0.0
  %405 = vmatpush1.msra.mxu0 0.0
  %406 = vmatprep.subr.mxu0 0.0
  %407 = vmatpush1.msra.mxu0 0.0
  %408 = vmatprep.subr.mxu0 0.0
  %409 = vmatpush1.msra.mxu0 0.0
  %410 = vmatprep.subr.mxu0 0.0
  %411 = vmatpush1.msra.mxu0 0.0
  %412 = vmatprep.subr.mxu0 0.0
  %413 = vmatpush1.msra.mxu0 0.0
  %414 = vmatprep.subr.mxu0 0.0
  %415 = vmatpush1.msra.mxu0 0.0
  %416 = vmatprep.subr.mxu0 0.0
  %417 = vmatpush1.msra.mxu0 0.0
  %418 = vmatprep.subr.mxu0 0.0
  %419 = vmatpush1.msra.mxu0 0.0
  %420 = vmatprep.subr.mxu0 0.0
  %421 = vmatpush1.msra.mxu0 0.0
  %422 = vmatprep.subr.mxu0 0.0
  %423 = vmatpush1.msra.mxu0 0.0
  %424 = vmatprep.subr.mxu0 0.0
  %425 = vmatpush1.msra.mxu0 0.0
  %426 = vmatprep.mubr.f32.mxu0 0.0
  %427 = vmatmul.mubr.f32.gmra.mrb[0].mxu0 0.0
  %v428 = vpop.f32.mrb[0].mxu0
  %v429 = vadd.f32 0.0, %v428
  %v430 = vpop.f32.mrb[0].mxu0
  %v431 = vadd.f32 0.0, %v430
  %432 = vdwg.mxu0
  %433 = vmatprep.subr.mxu0 0.0
  %434 = vmatpush1.msra.mxu0 %v315
  %435 = vmatprep.subr.mxu0 0.0
  %436 = vmatpush1.msra.mxu0 %v318
  %437 = vmatprep.subr.mxu0 0.0
  %438 = vmatpush1.msra.mxu0 %v321
  %439 = vmatprep.subr.mxu0 0.0
  %440 = vmatpush1.msra.mxu0 %v324
  %441 = vmatprep.subr.mxu0 0.0
  %442 = vmatpush1.msra.mxu0 %v327
  %443 = vmatprep.subr.mxu0 0.0
  %444 = vmatpush1.msra.mxu0 %v330
  %445 = vmatprep.subr.mxu0 0.0
  %446 = vmatpush1.msra.mxu0 %v333
  %447 = vmatprep.subr.mxu0 0.0
  %448 = vmatpush1.msra.mxu0 %v336
  %449 = vmatprep.subr.mxu0 0.0
  %450 = vmatpush1.msra.mxu0 %v339
  %451 = vmatprep.subr.mxu0 0.0
  %452 = vmatpush1.msra.mxu0 %v342
  %453 = vmatprep.subr.mxu0 0.0
  %454 = vmatpush1.msra.mxu0 %v345
  %455 = vmatprep.subr.mxu0 0.0
  %456 = vmatpush1.msra.mxu0 %v348
  %457 = vmatprep.subr.mxu0 0.0
  %458 = vmatpush1.msra.mxu0 %v351
  %459 = vmatprep.subr.mxu0 0.0
  %460 = vmatpush1.msra.mxu0 %v354
  %461 = vmatprep.subr.mxu0 0.0
  %462 = vmatpush1.msra.mxu0 %v357
  %463 = vmatprep.subr.mxu0 0.0
  %464 = vmatpush1.msra.mxu0 %v360
  %465 = vmatprep.subr.mxu0 0.0
  %466 = vmatpush1.msra.mxu0 0.0
  %467 = vmatprep.subr.mxu0 0.0
  %468 = vmatpush1.msra.mxu0 0.0
  %469 = vmatprep.subr.mxu0 0.0
  %470 = vmatpush1.msra.mxu0 0.0
  %471 = vmatprep.subr.mxu0 0.0
  %472 = vmatpush1.msra.mxu0 0.0
  %473 = vmatprep.subr.mxu0 0.0
  %474 = vmatpush1.msra.mxu0 0.0
  %475 = vmatprep.subr.mxu0 0.0
  %476 = vmatpush1.msra.mxu0 0.0
  %477 = vmatprep.subr.mxu0 0.0
  %478 = vmatpush1.msra.mxu0 0.0
  %479 = vmatprep.subr.mxu0 0.0
  %480 = vmatpush1.msra.mxu0 0.0
  %481 = vmatprep.subr.mxu0 0.0
  %482 = vmatpush1.msra.mxu0 0.0
  %483 = vmatprep.subr.mxu0 0.0
  %484 = vmatpush1.msra.mxu0 0.0
  %485 = vmatprep.subr.mxu0 0.0
  %486 = vmatpush1.msra.mxu0 0.0
  %487 = vmatprep.subr.mxu0 0.0
  %488 = vmatpush1.msra.mxu0 0.0
  %489 = vmatprep.subr.mxu0 0.0
  %490 = vmatpush1.msra.mxu0 0.0
  %491 = vmatprep.subr.mxu0 0.0
  %492 = vmatpush1.msra.mxu0 0.0
  %493 = vmatprep.subr.mxu0 0.0
  %494 = vmatpush1.msra.mxu0 0.0
  %495 = vmatprep.subr.mxu0 0.0
  %496 = vmatpush1.msra.mxu0 0.0
  %497 = vmatprep.mubr.f32.mxu0 0.0
  %498 = vmatmul.mubr.f32.gmra.mrb[0].mxu0 0.0
  %v499 = vpop.f32.mrb[0].mxu0
  %v500 = vadd.f32 0.0, %v499
  %v501 = vpop.f32.mrb[0].mxu0
  %502 = vdwg.mxu0
  %v503 = vadd.f32 %v162, %v429
  %v504 = vxor.u32 %v503, 2147483648
  %v505 = vmul.f32 %v504, 1.442695
  %v506 = vpow.pop %v505
  %v507 = vadd.f32 %v506, 1.0
  %v508 = vrcp.pop %v507
  %v509 = vmul.f32 1.0, %v508
  %v510 = vadd.f32 %v164, %v431
  %v511 = vxor.u32 %v510, 2147483648
  %v512 = vmul.f32 %v511, 1.442695
  %v513 = vpow.pop %v512
  %v514 = vadd.f32 %v513, 1.0
  %v515 = vrcp.pop %v514
  %v516 = vmul.f32 1.0, %v515
  %v518 = vlaneseq
  %v519 = vshrl.u32 %v518, 7
  %v520 = vsub.s32 0, %v519
  %v521 = vrot.slane %v361, %v520
  %v523 = vadd.f32 %v500, %v521
  %v524 = vmul.f32 %v509, %v523
  %v525 = vadd.f32 %v275, %v524
  %v526 = vtanh.pop %v525
  %v527 = vsub.f32 1.0, %v516
  %v528 = vmul.f32 %v527, %v526
  %v529 = vmul.f32 %v516, 0.0
  %v530 = vadd.f32 %v528, %v529
  %531 = vmatprep.subr.mxu0 %v314
  %532 = vmatpush1.msra.mxu0 %v313
  %533 = vmatprep.subr.mxu0 %v317
  %534 = vmatpush1.msra.mxu0 %v316
  %535 = vmatprep.subr.mxu0 %v320
  %536 = vmatpush1.msra.mxu0 %v319
  %537 = vmatprep.subr.mxu0 %v323
  %538 = vmatpush1.msra.mxu0 %v322
  %539 = vmatprep.subr.mxu0 %v326
  %540 = vmatpush1.msra.mxu0 %v325
  %541 = vmatprep.subr.mxu0 %v329
  %542 = vmatpush1.msra.mxu0 %v328
  %543 = vmatprep.subr.mxu0 %v332
  %544 = vmatpush1.msra.mxu0 %v331
  %545 = vmatprep.subr.mxu0 %v335
  %546 = vmatpush1.msra.mxu0 %v334
  %547 = vmatprep.subr.mxu0 %v338
  %548 = vmatpush1.msra.mxu0 %v337
  %549 = vmatprep.subr.mxu0 %v341
  %550 = vmatpush1.msra.mxu0 %v340
  %551 = vmatprep.subr.mxu0 %v344
  %552 = vmatpush1.msra.mxu0 %v343
  %553 = vmatprep.subr.mxu0 %v347
  %554 = vmatpush1.msra.mxu0 %v346
  %555 = vmatprep.subr.mxu0 %v350
  %556 = vmatpush1.msra.mxu0 %v349
  %557 = vmatprep.subr.mxu0 %v353
  %558 = vmatpush1.msra.mxu0 %v352
  %559 = vmatprep.subr.mxu0 %v356
  %560 = vmatpush1.msra.mxu0 %v355
  %561 = vmatprep.subr.mxu0 %v359
  %562 = vmatpush1.msra.mxu0 %v358
  %563 = vmatprep.subr.mxu0 0.0
  %564 = vmatpush1.msra.mxu0 0.0
  %565 = vmatprep.subr.mxu0 0.0
  %566 = vmatpush1.msra.mxu0 0.0
  %567 = vmatprep.subr.mxu0 0.0
  %568 = vmatpush1.msra.mxu0 0.0
  %569 = vmatprep.subr.mxu0 0.0
  %570 = vmatpush1.msra.mxu0 0.0
  %571 = vmatprep.subr.mxu0 0.0
  %572 = vmatpush1.msra.mxu0 0.0
  %573 = vmatprep.subr.mxu0 0.0
  %574 = vmatpush1.msra.mxu0 0.0
  %575 = vmatprep.subr.mxu0 0.0
  %576 = vmatpush1.msra.mxu0 0.0
  %577 = vmatprep.subr.mxu0 0.0
  %578 = vmatpush1.msra.mxu0 0.0
  %579 = vmatprep.subr.mxu0 0.0
  %580 = vmatpush1.msra.mxu0 0.0
  %581 = vmatprep.subr.mxu0 0.0
  %582 = vmatpush1.msra.mxu0 0.0
  %583 = vmatprep.subr.mxu0 0.0
  %584 = vmatpush1.msra.mxu0 0.0
  %585 = vmatprep.subr.mxu0 0.0
  %586 = vmatpush1.msra.mxu0 0.0
  %587 = vmatprep.subr.mxu0 0.0
  %588 = vmatpush1.msra.mxu0 0.0
  %589 = vmatprep.subr.mxu0 0.0
  %590 = vmatpush1.msra.mxu0 0.0
  %591 = vmatprep.subr.mxu0 0.0
  %592 = vmatpush1.msra.mxu0 0.0
  %593 = vmatprep.subr.mxu0 0.0
  %594 = vmatpush1.msra.mxu0 0.0
  %595 = vmatprep.mubr.f32.mxu0 0.0
  %596 = vmatmul.mubr.f32.gmra.mrb[0].mxu0 %v530
  %v597 = vpop.f32.mrb[0].mxu0
  %v598 = vadd.f32 0.0, %v597
  %v599 = vpop.f32.mrb[0].mxu0
  %v600 = vadd.f32 0.0, %v599
  %601 = vdwg.mxu0
  %602 = vmatprep.subr.mxu0 0.0
  %603 = vmatpush1.msra.mxu0 %v315
  %604 = vmatprep.subr.mxu0 0.0
  %605 = vmatpush1.msra.mxu0 %v318
  %606 = vmatprep.subr.mxu0 0.0
  %607 = vmatpush1.msra.mxu0 %v321
  %608 = vmatprep.subr.mxu0 0.0
  %609 = vmatpush1.msra.mxu0 %v324
  %610 = vmatprep.subr.mxu0 0.0
  %611 = vmatpush1.msra.mxu0 %v327
  %612 = vmatprep.subr.mxu0 0.0
  %613 = vmatpush1.msra.mxu0 %v330
  %614 = vmatprep.subr.mxu0 0.0
  %615 = vmatpush1.msra.mxu0 %v333
  %616 = vmatprep.subr.mxu0 0.0
  %617 = vmatpush1.msra.mxu0 %v336
  %618 = vmatprep.subr.mxu0 0.0
  %619 = vmatpush1.msra.mxu0 %v339
  %620 = vmatprep.subr.mxu0 0.0
  %621 = vmatpush1.msra.mxu0 %v342
  %622 = vmatprep.subr.mxu0 0.0
  %623 = vmatpush1.msra.mxu0 %v345
  %624 = vmatprep.subr.mxu0 0.0
  %625 = vmatpush1.msra.mxu0 %v348
  %626 = vmatprep.subr.mxu0 0.0
  %627 = vmatpush1.msra.mxu0 %v351
  %628 = vmatprep.subr.mxu0 0.0
  %629 = vmatpush1.msra.mxu0 %v354
  %630 = vmatprep.subr.mxu0 0.0
  %631 = vmatpush1.msra.mxu0 %v357
  %632 = vmatprep.subr.mxu0 0.0
  %633 = vmatpush1.msra.mxu0 %v360
  %634 = vmatprep.subr.mxu0 0.0
  %635 = vmatpush1.msra.mxu0 0.0
  %636 = vmatprep.subr.mxu0 0.0
  %637 = vmatpush1.msra.mxu0 0.0
  %638 = vmatprep.subr.mxu0 0.0
  %639 = vmatpush1.msra.mxu0 0.0
  %640 = vmatprep.subr.mxu0 0.0
  %641 = vmatpush1.msra.mxu0 0.0
  %642 = vmatprep.subr.mxu0 0.0
  %643 = vmatpush1.msra.mxu0 0.0
  %644 = vmatprep.subr.mxu0 0.0
  %645 = vmatpush1.msra.mxu0 0.0
  %646 = vmatprep.subr.mxu0 0.0
  %647 = vmatpush1.msra.mxu0 0.0
  %648 = vmatprep.subr.mxu0 0.0
  %649 = vmatpush1.msra.mxu0 0.0
  %650 = vmatprep.subr.mxu0 0.0
  %651 = vmatpush1.msra.mxu0 0.0
  %652 = vmatprep.subr.mxu0 0.0
  %653 = vmatpush1.msra.mxu0 0.0
  %654 = vmatprep.subr.mxu0 0.0
  %655 = vmatpush1.msra.mxu0 0.0
  %656 = vmatprep.subr.mxu0 0.0
  %657 = vmatpush1.msra.mxu0 0.0
  %658 = vmatprep.subr.mxu0 0.0
  %659 = vmatpush1.msra.mxu0 0.0
  %660 = vmatprep.subr.mxu0 0.0
  %661 = vmatpush1.msra.mxu0 0.0
  %662 = vmatprep.subr.mxu0 0.0
  %663 = vmatpush1.msra.mxu0 0.0
  %664 = vmatprep.subr.mxu0 0.0
  %665 = vmatpush1.msra.mxu0 0.0
  %666 = vmatprep.mubr.f32.mxu0 0.0
  %667 = vmatmul.mubr.f32.gmra.mrb[0].mxu0 %v530
  %v668 = vpop.f32.mrb[0].mxu0
  %v669 = vadd.f32 0.0, %v668
  %v670 = vpop.f32.mrb[0].mxu0
  %671 = vdwg.mxu0
  %v672 = vadd.f32 %v168, %v598
  %v673 = vxor.u32 %v672, 2147483648
  %v674 = vmul.f32 %v673, 1.442695
  %v675 = vpow.pop %v674
  %v676 = vadd.f32 %v675, 1.0
  %v677 = vrcp.pop %v676
  %v678 = vmul.f32 1.0, %v677
  %v679 = vadd.f32 %v170, %v600
  %v680 = vxor.u32 %v679, 2147483648
  %v681 = vmul.f32 %v680, 1.442695
  %v682 = vpow.pop %v681
  %v683 = vadd.f32 %v682, 1.0
  %v684 = vrcp.pop %v683
  %v685 = vmul.f32 1.0, %v684
  %v686 = vadd.f32 %v669, %v521
  %v687 = vmul.f32 %v678, %v686
  %v688 = vadd.f32 %v280, %v687
  %v689 = vtanh.pop %v688
  %v690 = vsub.f32 1.0, %v685
  %v691 = vmul.f32 %v690, %v689
  %v692 = vmul.f32 %v685, %v530
  %v693 = vadd.f32 %v691, %v692
  %694 = vmatprep.subr.mxu0 %v314
  %695 = vmatpush1.msra.mxu0 %v313
  %696 = vmatprep.subr.mxu0 %v317
  %697 = vmatpush1.msra.mxu0 %v316
  %698 = vmatprep.subr.mxu0 %v320
  %699 = vmatpush1.msra.mxu0 %v319
  %700 = vmatprep.subr.mxu0 %v323
  %701 = vmatpush1.msra.mxu0 %v322
  %702 = vmatprep.subr.mxu0 %v326
  %703 = vmatpush1.msra.mxu0 %v325
  %704 = vmatprep.subr.mxu0 %v329
  %705 = vmatpush1.msra.mxu0 %v328
  %706 = vmatprep.subr.mxu0 %v332
  %707 = vmatpush1.msra.mxu0 %v331
  %708 = vmatprep.subr.mxu0 %v335
  %709 = vmatpush1.msra.mxu0 %v334
  %710 = vmatprep.subr.mxu0 %v338
  %711 = vmatpush1.msra.mxu0 %v337
  %712 = vmatprep.subr.mxu0 %v341
  %713 = vmatpush1.msra.mxu0 %v340
  %714 = vmatprep.subr.mxu0 %v344
  %715 = vmatpush1.msra.mxu0 %v343
  %716 = vmatprep.subr.mxu0 %v347
  %717 = vmatpush1.msra.mxu0 %v346
  %718 = vmatprep.subr.mxu0 %v350
  %719 = vmatpush1.msra.mxu0 %v349
  %720 = vmatprep.subr.mxu0 %v353
  %721 = vmatpush1.msra.mxu0 %v352
  %722 = vmatprep.subr.mxu0 %v356
  %723 = vmatpush1.msra.mxu0 %v355
  %724 = vmatprep.subr.mxu0 %v359
  %725 = vmatpush1.msra.mxu0 %v358
  %726 = vmatprep.subr.mxu0 0.0
  %727 = vmatpush1.msra.mxu0 0.0
  %728 = vmatprep.subr.mxu0 0.0
  %729 = vmatpush1.msra.mxu0 0.0
  %730 = vmatprep.subr.mxu0 0.0
  %731 = vmatpush1.msra.mxu0 0.0
  %732 = vmatprep.subr.mxu0 0.0
  %733 = vmatpush1.msra.mxu0 0.0
  %734 = vmatprep.subr.mxu0 0.0
  %735 = vmatpush1.msra.mxu0 0.0
  %736 = vmatprep.subr.mxu0 0.0
  %737 = vmatpush1.msra.mxu0 0.0
  %738 = vmatprep.subr.mxu0 0.0
  %739 = vmatpush1.msra.mxu0 0.0
  %740 = vmatprep.subr.mxu0 0.0
  %741 = vmatpush1.msra.mxu0 0.0
  %742 = vmatprep.subr.mxu0 0.0
  %743 = vmatpush1.msra.mxu0 0.0
  %744 = vmatprep.subr.mxu0 0.0
  %745 = vmatpush1.msra.mxu0 0.0
  %746 = vmatprep.subr.mxu0 0.0
  %747 = vmatpush1.msra.mxu0 0.0
  %748 = vmatprep.subr.mxu0 0.0
  %749 = vmatpush1.msra.mxu0 0.0
  %750 = vmatprep.subr.mxu0 0.0
  %751 = vmatpush1.msra.mxu0 0.0
  %752 = vmatprep.subr.mxu0 0.0
  %753 = vmatpush1.msra.mxu0 0.0
  %754 = vmatprep.subr.mxu0 0.0
  %755 = vmatpush1.msra.mxu0 0.0
  %756 = vmatprep.subr.mxu0 0.0
  %757 = vmatpush1.msra.mxu0 0.0
  %758 = vmatprep.mubr.f32.mxu0 0.0
  %759 = vmatmul.mubr.f32.gmra.mrb[0].mxu0 %v693
  %v760 = vpop.f32.mrb[0].mxu0
  %v761 = vadd.f32 0.0, %v760
  %v762 = vpop.f32.mrb[0].mxu0
  %v763 = vadd.f32 0.0, %v762
  %764 = vdwg.mxu0
  %765 = vmatprep.subr.mxu0 0.0
  %766 = vmatpush1.msra.mxu0 %v315
  %767 = vmatprep.subr.mxu0 0.0
  %768 = vmatpush1.msra.mxu0 %v318
  %769 = vmatprep.subr.mxu0 0.0
  %770 = vmatpush1.msra.mxu0 %v321
  %771 = vmatprep.subr.mxu0 0.0
  %772 = vmatpush1.msra.mxu0 %v324
  %773 = vmatprep.subr.mxu0 0.0
  %774 = vmatpush1.msra.mxu0 %v327
  %775 = vmatprep.subr.mxu0 0.0
  %776 = vmatpush1.msra.mxu0 %v330
  %777 = vmatprep.subr.mxu0 0.0
  %778 = vmatpush1.msra.mxu0 %v333
  %779 = vmatprep.subr.mxu0 0.0
  %780 = vmatpush1.msra.mxu0 %v336
  %781 = vmatprep.subr.mxu0 0.0
  %782 = vmatpush1.msra.mxu0 %v339
  %783 = vmatprep.subr.mxu0 0.0
  %784 = vmatpush1.msra.mxu0 %v342
  %785 = vmatprep.subr.mxu0 0.0
  %786 = vmatpush1.msra.mxu0 %v345
  %787 = vmatprep.subr.mxu0 0.0
  %788 = vmatpush1.msra.mxu0 %v348
  %789 = vmatprep.subr.mxu0 0.0
  %790 = vmatpush1.msra.mxu0 %v351
  %791 = vmatprep.subr.mxu0 0.0
  %792 = vmatpush1.msra.mxu0 %v354
  %793 = vmatprep.subr.mxu0 0.0
  %794 = vmatpush1.msra.mxu0 %v357
  %795 = vmatprep.subr.mxu0 0.0
  %796 = vmatpush1.msra.mxu0 %v360
  %797 = vmatprep.subr.mxu0 0.0
  %798 = vmatpush1.msra.mxu0 0.0
  %799 = vmatprep.subr.mxu0 0.0
  %800 = vmatpush1.msra.mxu0 0.0
  %801 = vmatprep.subr.mxu0 0.0
  %802 = vmatpush1.msra.mxu0 0.0
  %803 = vmatprep.subr.mxu0 0.0
  %804 = vmatpush1.msra.mxu0 0.0
  %805 = vmatprep.subr.mxu0 0.0
  %806 = vmatpush1.msra.mxu0 0.0
  %807 = vmatprep.subr.mxu0 0.0
  %808 = vmatpush1.msra.mxu0 0.0
  %809 = vmatprep.subr.mxu0 0.0
  %810 = vmatpush1.msra.mxu0 0.0
  %811 = vmatprep.subr.mxu0 0.0
  %812 = vmatpush1.msra.mxu0 0.0
  %813 = vmatprep.subr.mxu0 0.0
  %814 = vmatpush1.msra.mxu0 0.0
  %815 = vmatprep.subr.mxu0 0.0
  %816 = vmatpush1.msra.mxu0 0.0
  %817 = vmatprep.subr.mxu0 0.0
  %818 = vmatpush1.msra.mxu0 0.0
  %819 = vmatprep.subr.mxu0 0.0
  %820 = vmatpush1.msra.mxu0 0.0
  %821 = vmatprep.subr.mxu0 0.0
  %822 = vmatpush1.msra.mxu0 0.0
  %823 = vmatprep.subr.mxu0 0.0
  %824 = vmatpush1.msra.mxu0 0.0
  %825 = vmatprep.subr.mxu0 0.0
  %826 = vmatpush1.msra.mxu0 0.0
  %827 = vmatprep.subr.mxu0 0.0
  %828 = vmatpush1.msra.mxu0 0.0
  %829 = vmatprep.mubr.f32.mxu0 0.0
  %830 = vmatmul.mubr.f32.gmra.mrb[0].mxu0 %v693
  %v831 = vpop.f32.mrb[0].mxu0
  %v832 = vadd.f32 0.0, %v831
  %v833 = vpop.f32.mrb[0].mxu0
  %834 = vdwg.mxu0
  %v835 = vadd.f32 %v174, %v761
  %v836 = vxor.u32 %v835, 2147483648
  %v837 = vmul.f32 %v836, 1.442695
  %v838 = vpow.pop %v837
  %v839 = vadd.f32 %v838, 1.0
  %v840 = vrcp.pop %v839
  %v841 = vmul.f32 1.0, %v840
  %v842 = vadd.f32 %v176, %v763
  %v843 = vxor.u32 %v842, 2147483648
  %v844 = vmul.f32 %v843, 1.442695
  %v845 = vpow.pop %v844
  %v846 = vadd.f32 %v845, 1.0
  %v847 = vrcp.pop %v846
  %v848 = vmul.f32 1.0, %v847
  %v849 = vadd.f32 %v832, %v521
  %v850 = vmul.f32 %v841, %v849
  %v851 = vadd.f32 %v285, %v850
  %v852 = vtanh.pop %v851
  %v853 = vsub.f32 1.0, %v848
  %v854 = vmul.f32 %v853, %v852
  %v855 = vmul.f32 %v848, %v693
  %v856 = vadd.f32 %v854, %v855
  %857 = vmatprep.subr.mxu0 %v314
  %858 = vmatpush1.msra.mxu0 %v313
  %859 = vmatprep.subr.mxu0 %v317
  %860 = vmatpush1.msra.mxu0 %v316
  %861 = vmatprep.subr.mxu0 %v320
  %862 = vmatpush1.msra.mxu0 %v319
  %863 = vmatprep.subr.mxu0 %v323
  %864 = vmatpush1.msra.mxu0 %v322
  %865 = vmatprep.subr.mxu0 %v326
  %866 = vmatpush1.msra.mxu0 %v325
  %867 = vmatprep.subr.mxu0 %v329
  %868 = vmatpush1.msra.mxu0 %v328
  %869 = vmatprep.subr.mxu0 %v332
  %870 = vmatpush1.msra.mxu0 %v331
  %871 = vmatprep.subr.mxu0 %v335
  %872 = vmatpush1.msra.mxu0 %v334
  %873 = vmatprep.subr.mxu0 %v338
  %874 = vmatpush1.msra.mxu0 %v337
  %875 = vmatprep.subr.mxu0 %v341
  %876 = vmatpush1.msra.mxu0 %v340
  %877 = vmatprep.subr.mxu0 %v344
  %878 = vmatpush1.msra.mxu0 %v343
  %879 = vmatprep.subr.mxu0 %v347
  %880 = vmatpush1.msra.mxu0 %v346
  %881 = vmatprep.subr.mxu0 %v350
  %882 = vmatpush1.msra.mxu0 %v349
  %883 = vmatprep.subr.mxu0 %v353
  %884 = vmatpush1.msra.mxu0 %v352
  %885 = vmatprep.subr.mxu0 %v356
  %886 = vmatpush1.msra.mxu0 %v355
  %887 = vmatprep.subr.mxu0 %v359
  %888 = vmatpush1.msra.mxu0 %v358
  %889 = vmatprep.subr.mxu0 0.0
  %890 = vmatpush1.msra.mxu0 0.0
  %891 = vmatprep.subr.mxu0 0.0
  %892 = vmatpush1.msra.mxu0 0.0
  %893 = vmatprep.subr.mxu0 0.0
  %894 = vmatpush1.msra.mxu0 0.0
  %895 = vmatprep.subr.mxu0 0.0
  %896 = vmatpush1.msra.mxu0 0.0
  %897 = vmatprep.subr.mxu0 0.0
  %898 = vmatpush1.msra.mxu0 0.0
  %899 = vmatprep.subr.mxu0 0.0
  %900 = vmatpush1.msra.mxu0 0.0
  %901 = vmatprep.subr.mxu0 0.0
  %902 = vmatpush1.msra.mxu0 0.0
  %903 = vmatprep.subr.mxu0 0.0
  %904 = vmatpush1.msra.mxu0 0.0
  %905 = vmatprep.subr.mxu0 0.0
  %906 = vmatpush1.msra.mxu0 0.0
  %907 = vmatprep.subr.mxu0 0.0
  %908 = vmatpush1.msra.mxu0 0.0
  %909 = vmatprep.subr.mxu0 0.0
  %910 = vmatpush1.msra.mxu0 0.0
  %911 = vmatprep.subr.mxu0 0.0
  %912 = vmatpush1.msra.mxu0 0.0
  %913 = vmatprep.subr.mxu0 0.0
  %914 = vmatpush1.msra.mxu0 0.0
  %915 = vmatprep.subr.mxu0 0.0
  %916 = vmatpush1.msra.mxu0 0.0
  %917 = vmatprep.subr.mxu0 0.0
  %918 = vmatpush1.msra.mxu0 0.0
  %919 = vmatprep.subr.mxu0 0.0
  %920 = vmatpush1.msra.mxu0 0.0
  %921 = vmatprep.mubr.f32.mxu0 0.0
  %922 = vmatmul.mubr.f32.gmra.mrb[0].mxu0 %v856
  %v923 = vpop.f32.mrb[0].mxu0
  %v924 = vadd.f32 0.0, %v923
  %v925 = vpop.f32.mrb[0].mxu0
  %v926 = vadd.f32 0.0, %v925
  %927 = vdwg.mxu0
  %928 = vmatprep.subr.mxu0 0.0
  %929 = vmatpush1.msra.mxu0 %v315
  %930 = vmatprep.subr.mxu0 0.0
  %931 = vmatpush1.msra.mxu0 %v318
  %932 = vmatprep.subr.mxu0 0.0
  %933 = vmatpush1.msra.mxu0 %v321
  %934 = vmatprep.subr.mxu0 0.0
  %935 = vmatpush1.msra.mxu0 %v324
  %936 = vmatprep.subr.mxu0 0.0
  %937 = vmatpush1.msra.mxu0 %v327
  %938 = vmatprep.subr.mxu0 0.0
  %939 = vmatpush1.msra.mxu0 %v330
  %940 = vmatprep.subr.mxu0 0.0
  %941 = vmatpush1.msra.mxu0 %v333
  %942 = vmatprep.subr.mxu0 0.0
  %943 = vmatpush1.msra.mxu0 %v336
  %944 = vmatprep.subr.mxu0 0.0
  %945 = vmatpush1.msra.mxu0 %v339
  %946 = vmatprep.subr.mxu0 0.0
  %947 = vmatpush1.msra.mxu0 %v342
  %948 = vmatprep.subr.mxu0 0.0
  %949 = vmatpush1.msra.mxu0 %v345
  %950 = vmatprep.subr.mxu0 0.0
  %951 = vmatpush1.msra.mxu0 %v348
  %952 = vmatprep.subr.mxu0 0.0
  %953 = vmatpush1.msra.mxu0 %v351
  %954 = vmatprep.subr.mxu0 0.0
  %955 = vmatpush1.msra.mxu0 %v354
  %956 = vmatprep.subr.mxu0 0.0
  %957 = vmatpush1.msra.mxu0 %v357
  %958 = vmatprep.subr.mxu0 0.0
  %959 = vmatpush1.msra.mxu0 %v360
  %960 = vmatprep.subr.mxu0 0.0
  %961 = vmatpush1.msra.mxu0 0.0
  %962 = vmatprep.subr.mxu0 0.0
  %963 = vmatpush1.msra.mxu0 0.0
  %964 = vmatprep.subr.mxu0 0.0
  %965 = vmatpush1.msra.mxu0 0.0
  %966 = vmatprep.subr.mxu0 0.0
  %967 = vmatpush1.msra.mxu0 0.0
  %968 = vmatprep.subr.mxu0 0.0
  %969 = vmatpush1.msra.mxu0 0.0
  %970 = vmatprep.subr.mxu0 0.0
  %971 = vmatpush1.msra.mxu0 0.0
  %972 = vmatprep.subr.mxu0 0.0
  %973 = vmatpush1.msra.mxu0 0.0
  %974 = vmatprep.subr.mxu0 0.0
  %975 = vmatpush1.msra.mxu0 0.0
  %976 = vmatprep.subr.mxu0 0.0
  %977 = vmatpush1.msra.mxu0 0.0
  %978 = vmatprep.subr.mxu0 0.0
  %979 = vmatpush1.msra.mxu0 0.0
  %980 = vmatprep.subr.mxu0 0.0
  %981 = vmatpush1.msra.mxu0 0.0
  %982 = vmatprep.subr.mxu0 0.0
  %983 = vmatpush1.msra.mxu0 0.0
  %984 = vmatprep.subr.mxu0 0.0
  %985 = vmatpush1.msra.mxu0 0.0
  %986 = vmatprep.subr.mxu0 0.0
  %987 = vmatpush1.msra.mxu0 0.0
  %988 = vmatprep.subr.mxu0 0.0
  %989 = vmatpush1.msra.mxu0 0.0
  %990 = vmatprep.subr.mxu0 0.0
  %991 = vmatpush1.msra.mxu0 0.0
  %992 = vmatprep.mubr.f32.mxu0 0.0
  %993 = vmatmul.mubr.f32.gmra.mrb[0].mxu0 %v856
  %v994 = vpop.f32.mrb[0].mxu0
  %v995 = vadd.f32 0.0, %v994
  %v996 = vpop.f32.mrb[0].mxu0
  %997 = vdwg.mxu0
  %v998 = vadd.f32 %v180, %v924
  %v999 = vxor.u32 %v998, 2147483648
  %v1000 = vmul.f32 %v999, 1.442695
  %v1001 = vpow.pop %v1000
  %v1002 = vadd.f32 %v1001, 1.0
  %v1003 = vrcp.pop %v1002
  %v1004 = vmul.f32 1.0, %v1003
  %v1005 = vadd.f32 %v182, %v926
  %v1006 = vxor.u32 %v1005, 2147483648
  %v1007 = vmul.f32 %v1006, 1.442695
  %v1008 = vpow.pop %v1007
  %v1009 = vadd.f32 %v1008, 1.0
  %v1010 = vrcp.pop %v1009
  %v1011 = vmul.f32 1.0, %v1010
  %v1012 = vadd.f32 %v995, %v521
  %v1013 = vmul.f32 %v1004, %v1012
  %v1014 = vadd.f32 %v290, %v1013
  %v1015 = vtanh.pop %v1014
  %v1016 = vsub.f32 1.0, %v1011
  %v1017 = vmul.f32 %v1016, %v1015
  %v1018 = vmul.f32 %v1011, %v856
  %v1019 = vadd.f32 %v1017, %v1018
  %1020 = vmatprep.subr.mxu0 %v314
  %1021 = vmatpush1.msra.mxu0 %v313
  %1022 = vmatprep.subr.mxu0 %v317
  %1023 = vmatpush1.msra.mxu0 %v316
  %1024 = vmatprep.subr.mxu0 %v320
  %1025 = vmatpush1.msra.mxu0 %v319
  %1026 = vmatprep.subr.mxu0 %v323
  %1027 = vmatpush1.msra.mxu0 %v322
  %1028 = vmatprep.subr.mxu0 %v326
  %1029 = vmatpush1.msra.mxu0 %v325
  %1030 = vmatprep.subr.mxu0 %v329
  %1031 = vmatpush1.msra.mxu0 %v328
  %1032 = vmatprep.subr.mxu0 %v332
  %1033 = vmatpush1.msra.mxu0 %v331
  %1034 = vmatprep.subr.mxu0 %v335
  %1035 = vmatpush1.msra.mxu0 %v334
  %1036 = vmatprep.subr.mxu0 %v338
  %1037 = vmatpush1.msra.mxu0 %v337
  %1038 = vmatprep.subr.mxu0 %v341
  %1039 = vmatpush1.msra.mxu0 %v340
  %1040 = vmatprep.subr.mxu0 %v344
  %1041 = vmatpush1.msra.mxu0 %v343
  %1042 = vmatprep.subr.mxu0 %v347
  %1043 = vmatpush1.msra.mxu0 %v346
  %1044 = vmatprep.subr.mxu0 %v350
  %1045 = vmatpush1.msra.mxu0 %v349
  %1046 = vmatprep.subr.mxu0 %v353
  %1047 = vmatpush1.msra.mxu0 %v352
  %1048 = vmatprep.subr.mxu0 %v356
  %1049 = vmatpush1.msra.mxu0 %v355
  %1050 = vmatprep.subr.mxu0 %v359
  %1051 = vmatpush1.msra.mxu0 %v358
  %1052 = vmatprep.subr.mxu0 0.0
  %1053 = vmatpush1.msra.mxu0 0.0
  %1054 = vmatprep.subr.mxu0 0.0
  %1055 = vmatpush1.msra.mxu0 0.0
  %1056 = vmatprep.subr.mxu0 0.0
  %1057 = vmatpush1.msra.mxu0 0.0
  %1058 = vmatprep.subr.mxu0 0.0
  %1059 = vmatpush1.msra.mxu0 0.0
  %1060 = vmatprep.subr.mxu0 0.0
  %1061 = vmatpush1.msra.mxu0 0.0
  %1062 = vmatprep.subr.mxu0 0.0
  %1063 = vmatpush1.msra.mxu0 0.0
  %1064 = vmatprep.subr.mxu0 0.0
  %1065 = vmatpush1.msra.mxu0 0.0
  %1066 = vmatprep.subr.mxu0 0.0
  %1067 = vmatpush1.msra.mxu0 0.0
  %1068 = vmatprep.subr.mxu0 0.0
  %1069 = vmatpush1.msra.mxu0 0.0
  %1070 = vmatprep.subr.mxu0 0.0
  %1071 = vmatpush1.msra.mxu0 0.0
  %1072 = vmatprep.subr.mxu0 0.0
  %1073 = vmatpush1.msra.mxu0 0.0
  %1074 = vmatprep.subr.mxu0 0.0
  %1075 = vmatpush1.msra.mxu0 0.0
  %1076 = vmatprep.subr.mxu0 0.0
  %1077 = vmatpush1.msra.mxu0 0.0
  %1078 = vmatprep.subr.mxu0 0.0
  %1079 = vmatpush1.msra.mxu0 0.0
  %1080 = vmatprep.subr.mxu0 0.0
  %1081 = vmatpush1.msra.mxu0 0.0
  %1082 = vmatprep.subr.mxu0 0.0
  %1083 = vmatpush1.msra.mxu0 0.0
  %1084 = vmatprep.mubr.f32.mxu0 0.0
  %1085 = vmatmul.mubr.f32.gmra.mrb[0].mxu0 %v1019
  %v1086 = vpop.f32.mrb[0].mxu0
  %v1087 = vadd.f32 0.0, %v1086
  %v1088 = vpop.f32.mrb[0].mxu0
  %v1089 = vadd.f32 0.0, %v1088
  %1090 = vdwg.mxu0
  %1091 = vmatprep.subr.mxu0 0.0
  %1092 = vmatpush1.msra.mxu0 %v315
  %1093 = vmatprep.subr.mxu0 0.0
  %1094 = vmatpush1.msra.mxu0 %v318
  %1095 = vmatprep.subr.mxu0 0.0
  %1096 = vmatpush1.msra.mxu0 %v321
  %1097 = vmatprep.subr.mxu0 0.0
  %1098 = vmatpush1.msra.mxu0 %v324
  %1099 = vmatprep.subr.mxu0 0.0
  %1100 = vmatpush1.msra.mxu0 %v327
  %1101 = vmatprep.subr.mxu0 0.0
  %1102 = vmatpush1.msra.mxu0 %v330
  %1103 = vmatprep.subr.mxu0 0.0
  %1104 = vmatpush1.msra.mxu0 %v333
  %1105 = vmatprep.subr.mxu0 0.0
  %1106 = vmatpush1.msra.mxu0 %v336
  %1107 = vmatprep.subr.mxu0 0.0
  %1108 = vmatpush1.msra.mxu0 %v339
  %1109 = vmatprep.subr.mxu0 0.0
  %1110 = vmatpush1.msra.mxu0 %v342
  %1111 = vmatprep.subr.mxu0 0.0
  %1112 = vmatpush1.msra.mxu0 %v345
  %1113 = vmatprep.subr.mxu0 0.0
  %1114 = vmatpush1.msra.mxu0 %v348
  %1115 = vmatprep.subr.mxu0 0.0
  %1116 = vmatpush1.msra.mxu0 %v351
  %1117 = vmatprep.subr.mxu0 0.0
  %1118 = vmatpush1.msra.mxu0 %v354
  %1119 = vmatprep.subr.mxu0 0.0
  %1120 = vmatpush1.msra.mxu0 %v357
  %1121 = vmatprep.subr.mxu0 0.0
  %1122 = vmatpush1.msra.mxu0 %v360
  %1123 = vmatprep.subr.mxu0 0.0
  %1124 = vmatpush1.msra.mxu0 0.0
  %1125 = vmatprep.subr.mxu0 0.0
  %1126 = vmatpush1.msra.mxu0 0.0
  %1127 = vmatprep.subr.mxu0 0.0
  %1128 = vmatpush1.msra.mxu0 0.0
  %1129 = vmatprep.subr.mxu0 0.0
  %1130 = vmatpush1.msra.mxu0 0.0
  %1131 = vmatprep.subr.mxu0 0.0
  %1132 = vmatpush1.msra.mxu0 0.0
  %1133 = vmatprep.subr.mxu0 0.0
  %1134 = vmatpush1.msra.mxu0 0.0
  %1135 = vmatprep.subr.mxu0 0.0
  %1136 = vmatpush1.msra.mxu0 0.0
  %1137 = vmatprep.subr.mxu0 0.0
  %1138 = vmatpush1.msra.mxu0 0.0
  %1139 = vmatprep.subr.mxu0 0.0
  %1140 = vmatpush1.msra.mxu0 0.0
  %1141 = vmatprep.subr.mxu0 0.0
  %1142 = vmatpush1.msra.mxu0 0.0
  %1143 = vmatprep.subr.mxu0 0.0
  %1144 = vmatpush1.msra.mxu0 0.0
  %1145 = vmatprep.subr.mxu0 0.0
  %1146 = vmatpush1.msra.mxu0 0.0
  %1147 = vmatprep.subr.mxu0 0.0
  %1148 = vmatpush1.msra.mxu0 0.0
  %1149 = vmatprep.subr.mxu0 0.0
  %1150 = vmatpush1.msra.mxu0 0.0
  %1151 = vmatprep.subr.mxu0 0.0
  %1152 = vmatpush1.msra.mxu0 0.0
  %1153 = vmatprep.subr.mxu0 0.0
  %1154 = vmatpush1.msra.mxu0 0.0
  %1155 = vmatprep.mubr.f32.mxu0 0.0
  %1156 = vmatmul.mubr.f32.gmra.mrb[0].mxu0 %v1019
  %v1157 = vpop.f32.mrb[0].mxu0
  %v1158 = vadd.f32 0.0, %v1157
  %v1159 = vpop.f32.mrb[0].mxu0
  %1160 = vdwg.mxu0
  %v1161 = vadd.f32 %v186, %v1087
  %v1162 = vxor.u32 %v1161, 2147483648
  %v1163 = vmul.f32 %v1162, 1.442695
  %v1164 = vpow.pop %v1163
  %v1165 = vadd.f32 %v1164, 1.0
  %v1166 = vrcp.pop %v1165
  %v1167 = vmul.f32 1.0, %v1166
  %v1168 = vadd.f32 %v188, %v1089
  %v1169 = vxor.u32 %v1168, 2147483648
  %v1170 = vmul.f32 %v1169, 1.442695
  %v1171 = vpow.pop %v1170
  %v1172 = vadd.f32 %v1171, 1.0
  %v1173 = vrcp.pop %v1172
  %v1174 = vmul.f32 1.0, %v1173
  %v1175 = vadd.f32 %v1158, %v521
  %v1176 = vmul.f32 %v1167, %v1175
  %v1177 = vadd.f32 %v295, %v1176
  %v1178 = vtanh.pop %v1177
  %v1179 = vsub.f32 1.0, %v1174
  %v1180 = vmul.f32 %v1179, %v1178
  %v1181 = vmul.f32 %v1174, %v1019
  %v1182 = vadd.f32 %v1180, %v1181
  %1183 = vmatprep.subr.mxu0 %v314
  %1184 = vmatpush1.msra.mxu0 %v313
  %1185 = vmatprep.subr.mxu0 %v317
  %1186 = vmatpush1.msra.mxu0 %v316
  %1187 = vmatprep.subr.mxu0 %v320
  %1188 = vmatpush1.msra.mxu0 %v319
  %1189 = vmatprep.subr.mxu0 %v323
  %1190 = vmatpush1.msra.mxu0 %v322
  %1191 = vmatprep.subr.mxu0 %v326
  %1192 = vmatpush1.msra.mxu0 %v325
  %1193 = vmatprep.subr.mxu0 %v329
  %1194 = vmatpush1.msra.mxu0 %v328
  %1195 = vmatprep.subr.mxu0 %v332
  %1196 = vmatpush1.msra.mxu0 %v331
  %1197 = vmatprep.subr.mxu0 %v335
  %1198 = vmatpush1.msra.mxu0 %v334
  %1199 = vmatprep.subr.mxu0 %v338
  %1200 = vmatpush1.msra.mxu0 %v337
  %1201 = vmatprep.subr.mxu0 %v341
  %1202 = vmatpush1.msra.mxu0 %v340
  %1203 = vmatprep.subr.mxu0 %v344
  %1204 = vmatpush1.msra.mxu0 %v343
  %1205 = vmatprep.subr.mxu0 %v347
  %1206 = vmatpush1.msra.mxu0 %v346
  %1207 = vmatprep.subr.mxu0 %v350
  %1208 = vmatpush1.msra.mxu0 %v349
  %1209 = vmatprep.subr.mxu0 %v353
  %1210 = vmatpush1.msra.mxu0 %v352
  %1211 = vmatprep.subr.mxu0 %v356
  %1212 = vmatpush1.msra.mxu0 %v355
  %1213 = vmatprep.subr.mxu0 %v359
  %1214 = vmatpush1.msra.mxu0 %v358
  %1215 = vmatprep.subr.mxu0 0.0
  %1216 = vmatpush1.msra.mxu0 0.0
  %1217 = vmatprep.subr.mxu0 0.0
  %1218 = vmatpush1.msra.mxu0 0.0
  %1219 = vmatprep.subr.mxu0 0.0
  %1220 = vmatpush1.msra.mxu0 0.0
  %1221 = vmatprep.subr.mxu0 0.0
  %1222 = vmatpush1.msra.mxu0 0.0
  %1223 = vmatprep.subr.mxu0 0.0
  %1224 = vmatpush1.msra.mxu0 0.0
  %1225 = vmatprep.subr.mxu0 0.0
  %1226 = vmatpush1.msra.mxu0 0.0
  %1227 = vmatprep.subr.mxu0 0.0
  %1228 = vmatpush1.msra.mxu0 0.0
  %1229 = vmatprep.subr.mxu0 0.0
  %1230 = vmatpush1.msra.mxu0 0.0
  %1231 = vmatprep.subr.mxu0 0.0
  %1232 = vmatpush1.msra.mxu0 0.0
  %1233 = vmatprep.subr.mxu0 0.0
  %1234 = vmatpush1.msra.mxu0 0.0
  %1235 = vmatprep.subr.mxu0 0.0
  %1236 = vmatpush1.msra.mxu0 0.0
  %1237 = vmatprep.subr.mxu0 0.0
  %1238 = vmatpush1.msra.mxu0 0.0
  %1239 = vmatprep.subr.mxu0 0.0
  %1240 = vmatpush1.msra.mxu0 0.0
  %1241 = vmatprep.subr.mxu0 0.0
  %1242 = vmatpush1.msra.mxu0 0.0
  %1243 = vmatprep.subr.mxu0 0.0
  %1244 = vmatpush1.msra.mxu0 0.0
  %1245 = vmatprep.subr.mxu0 0.0
  %1246 = vmatpush1.msra.mxu0 0.0
  %1247 = vmatprep.mubr.f32.mxu0 0.0
  %1248 = vmatmul.mubr.f32.gmra.mrb[0].mxu0 %v1182
  %v1249 = vpop.f32.mrb[0].mxu0
  %v1250 = vadd.f32 0.0, %v1249
  %v1251 = vpop.f32.mrb[0].mxu0
  %v1252 = vadd.f32 0.0, %v1251
  %1253 = vdwg.mxu0
  %1254 = vmatprep.subr.mxu0 0.0
  %1255 = vmatpush1.msra.mxu0 %v315
  %1256 = vmatprep.subr.mxu0 0.0
  %1257 = vmatpush1.msra.mxu0 %v318
  %1258 = vmatprep.subr.mxu0 0.0
  %1259 = vmatpush1.msra.mxu0 %v321
  %1260 = vmatprep.subr.mxu0 0.0
  %1261 = vmatpush1.msra.mxu0 %v324
  %1262 = vmatprep.subr.mxu0 0.0
  %1263 = vmatpush1.msra.mxu0 %v327
  %1264 = vmatprep.subr.mxu0 0.0
  %1265 = vmatpush1.msra.mxu0 %v330
  %1266 = vmatprep.subr.mxu0 0.0
  %1267 = vmatpush1.msra.mxu0 %v333
  %1268 = vmatprep.subr.mxu0 0.0
  %1269 = vmatpush1.msra.mxu0 %v336
  %1270 = vmatprep.subr.mxu0 0.0
  %1271 = vmatpush1.msra.mxu0 %v339
  %1272 = vmatprep.subr.mxu0 0.0
  %1273 = vmatpush1.msra.mxu0 %v342
  %1274 = vmatprep.subr.mxu0 0.0
  %1275 = vmatpush1.msra.mxu0 %v345
  %1276 = vmatprep.subr.mxu0 0.0
  %1277 = vmatpush1.msra.mxu0 %v348
  %1278 = vmatprep.subr.mxu0 0.0
  %1279 = vmatpush1.msra.mxu0 %v351
  %1280 = vmatprep.subr.mxu0 0.0
  %1281 = vmatpush1.msra.mxu0 %v354
  %1282 = vmatprep.subr.mxu0 0.0
  %1283 = vmatpush1.msra.mxu0 %v357
  %1284 = vmatprep.subr.mxu0 0.0
  %1285 = vmatpush1.msra.mxu0 %v360
  %1286 = vmatprep.subr.mxu0 0.0
  %1287 = vmatpush1.msra.mxu0 0.0
  %1288 = vmatprep.subr.mxu0 0.0
  %1289 = vmatpush1.msra.mxu0 0.0
  %1290 = vmatprep.subr.mxu0 0.0
  %1291 = vmatpush1.msra.mxu0 0.0
  %1292 = vmatprep.subr.mxu0 0.0
  %1293 = vmatpush1.msra.mxu0 0.0
  %1294 = vmatprep.subr.mxu0 0.0
  %1295 = vmatpush1.msra.mxu0 0.0
  %1296 = vmatprep.subr.mxu0 0.0
  %1297 = vmatpush1.msra.mxu0 0.0
  %1298 = vmatprep.subr.mxu0 0.0
  %1299 = vmatpush1.msra.mxu0 0.0
  %1300 = vmatprep.subr.mxu0 0.0
  %1301 = vmatpush1.msra.mxu0 0.0
  %1302 = vmatprep.subr.mxu0 0.0
  %1303 = vmatpush1.msra.mxu0 0.0
  %1304 = vmatprep.subr.mxu0 0.0
  %1305 = vmatpush1.msra.mxu0 0.0
  %1306 = vmatprep.subr.mxu0 0.0
  %1307 = vmatpush1.msra.mxu0 0.0
  %1308 = vmatprep.subr.mxu0 0.0
  %1309 = vmatpush1.msra.mxu0 0.0
  %1310 = vmatprep.subr.mxu0 0.0
  %1311 = vmatpush1.msra.mxu0 0.0
  %1312 = vmatprep.subr.mxu0 0.0
  %1313 = vmatpush1.msra.mxu0 0.0
  %1314 = vmatprep.subr.mxu0 0.0
  %1315 = vmatpush1.msra.mxu0 0.0
  %1316 = vmatprep.subr.mxu0 0.0
  %1317 = vmatpush1.msra.mxu0 0.0
  %1318 = vmatprep.mubr.f32.mxu0 0.0
  %1319 = vmatmul.mubr.f32.gmra.mrb[0].mxu0 %v1182
  %v1320 = vpop.f32.mrb[0].mxu0
  %v1321 = vadd.f32 0.0, %v1320
  %v1322 = vpop.f32.mrb[0].mxu0
  %1323 = vdwg.mxu0
  %v1324 = vadd.f32 %v192, %v1250
  %v1325 = vxor.u32 %v1324, 2147483648
  %v1326 = vmul.f32 %v1325, 1.442695
  %v1327 = vpow.pop %v1326
  %v1328 = vadd.f32 %v1327, 1.0
  %v1329 = vrcp.pop %v1328
  %v1330 = vmul.f32 1.0, %v1329
  %v1331 = vadd.f32 %v194, %v1252
  %v1332 = vxor.u32 %v1331, 2147483648
  %v1333 = vmul.f32 %v1332, 1.442695
  %v1334 = vpow.pop %v1333
  %v1335 = vadd.f32 %v1334, 1.0
  %v1336 = vrcp.pop %v1335
  %v1337 = vmul.f32 1.0, %v1336
  %v1338 = vadd.f32 %v1321, %v521
  %v1339 = vmul.f32 %v1330, %v1338
  %v1340 = vadd.f32 %v300, %v1339
  %v1341 = vtanh.pop %v1340
  %v1342 = vsub.f32 1.0, %v1337
  %v1343 = vmul.f32 %v1342, %v1341
  %v1344 = vmul.f32 %v1337, %v1182
  %v1345 = vadd.f32 %v1343, %v1344
  %1346 = vmatprep.subr.mxu0 %v314
  %1347 = vmatpush1.msra.mxu0 %v313
  %1348 = vmatprep.subr.mxu0 %v317
  %1349 = vmatpush1.msra.mxu0 %v316
  %1350 = vmatprep.subr.mxu0 %v320
  %1351 = vmatpush1.msra.mxu0 %v319
  %1352 = vmatprep.subr.mxu0 %v323
  %1353 = vmatpush1.msra.mxu0 %v322
  %1354 = vmatprep.subr.mxu0 %v326
  %1355 = vmatpush1.msra.mxu0 %v325
  %1356 = vmatprep.subr.mxu0 %v329
  %1357 = vmatpush1.msra.mxu0 %v328
  %1358 = vmatprep.subr.mxu0 %v332
  %1359 = vmatpush1.msra.mxu0 %v331
  %1360 = vmatprep.subr.mxu0 %v335
  %1361 = vmatpush1.msra.mxu0 %v334
  %1362 = vmatprep.subr.mxu0 %v338
  %1363 = vmatpush1.msra.mxu0 %v337
  %1364 = vmatprep.subr.mxu0 %v341
  %1365 = vmatpush1.msra.mxu0 %v340
  %1366 = vmatprep.subr.mxu0 %v344
  %1367 = vmatpush1.msra.mxu0 %v343
  %1368 = vmatprep.subr.mxu0 %v347
  %1369 = vmatpush1.msra.mxu0 %v346
  %1370 = vmatprep.subr.mxu0 %v350
  %1371 = vmatpush1.msra.mxu0 %v349
  %1372 = vmatprep.subr.mxu0 %v353
  %1373 = vmatpush1.msra.mxu0 %v352
  %1374 = vmatprep.subr.mxu0 %v356
  %1375 = vmatpush1.msra.mxu0 %v355
  %1376 = vmatprep.subr.mxu0 %v359
  %1377 = vmatpush1.msra.mxu0 %v358
  %1378 = vmatprep.subr.mxu0 0.0
  %1379 = vmatpush1.msra.mxu0 0.0
  %1380 = vmatprep.subr.mxu0 0.0
  %1381 = vmatpush1.msra.mxu0 0.0
  %1382 = vmatprep.subr.mxu0 0.0
  %1383 = vmatpush1.msra.mxu0 0.0
  %1384 = vmatprep.subr.mxu0 0.0
  %1385 = vmatpush1.msra.mxu0 0.0
  %1386 = vmatprep.subr.mxu0 0.0
  %1387 = vmatpush1.msra.mxu0 0.0
  %1388 = vmatprep.subr.mxu0 0.0
  %1389 = vmatpush1.msra.mxu0 0.0
  %1390 = vmatprep.subr.mxu0 0.0
  %1391 = vmatpush1.msra.mxu0 0.0
  %1392 = vmatprep.subr.mxu0 0.0
  %1393 = vmatpush1.msra.mxu0 0.0
  %1394 = vmatprep.subr.mxu0 0.0
  %1395 = vmatpush1.msra.mxu0 0.0
  %1396 = vmatprep.subr.mxu0 0.0
  %1397 = vmatpush1.msra.mxu0 0.0
  %1398 = vmatprep.subr.mxu0 0.0
  %1399 = vmatpush1.msra.mxu0 0.0
  %1400 = vmatprep.subr.mxu0 0.0
  %1401 = vmatpush1.msra.mxu0 0.0
  %1402 = vmatprep.subr.mxu0 0.0
  %1403 = vmatpush1.msra.mxu0 0.0
  %1404 = vmatprep.subr.mxu0 0.0
  %1405 = vmatpush1.msra.mxu0 0.0
  %1406 = vmatprep.subr.mxu0 0.0
  %1407 = vmatpush1.msra.mxu0 0.0
  %1408 = vmatprep.subr.mxu0 0.0
  %1409 = vmatpush1.msra.mxu0 0.0
  %1410 = vmatprep.mubr.f32.mxu0 0.0
  %1411 = vmatmul.mubr.f32.gmra.mrb[0].mxu0 %v1345
  %v1412 = vpop.f32.mrb[0].mxu0
  %v1413 = vadd.f32 0.0, %v1412
  %v1414 = vpop.f32.mrb[0].mxu0
  %v1415 = vadd.f32 0.0, %v1414
  %1416 = vdwg.mxu0
  %1417 = vmatprep.subr.mxu0 0.0
  %1418 = vmatpush1.msra.mxu0 %v315
  %1419 = vmatprep.subr.mxu0 0.0
  %1420 = vmatpush1.msra.mxu0 %v318
  %1421 = vmatprep.subr.mxu0 0.0
  %1422 = vmatpush1.msra.mxu0 %v321
  %1423 = vmatprep.subr.mxu0 0.0
  %1424 = vmatpush1.msra.mxu0 %v324
  %1425 = vmatprep.subr.mxu0 0.0
  %1426 = vmatpush1.msra.mxu0 %v327
  %1427 = vmatprep.subr.mxu0 0.0
  %1428 = vmatpush1.msra.mxu0 %v330
  %1429 = vmatprep.subr.mxu0 0.0
  %1430 = vmatpush1.msra.mxu0 %v333
  %1431 = vmatprep.subr.mxu0 0.0
  %1432 = vmatpush1.msra.mxu0 %v336
  %1433 = vmatprep.subr.mxu0 0.0
  %1434 = vmatpush1.msra.mxu0 %v339
  %1435 = vmatprep.subr.mxu0 0.0
  %1436 = vmatpush1.msra.mxu0 %v342
  %1437 = vmatprep.subr.mxu0 0.0
  %1438 = vmatpush1.msra.mxu0 %v345
  %1439 = vmatprep.subr.mxu0 0.0
  %1440 = vmatpush1.msra.mxu0 %v348
  %1441 = vmatprep.subr.mxu0 0.0
  %1442 = vmatpush1.msra.mxu0 %v351
  %1443 = vmatprep.subr.mxu0 0.0
  %1444 = vmatpush1.msra.mxu0 %v354
  %1445 = vmatprep.subr.mxu0 0.0
  %1446 = vmatpush1.msra.mxu0 %v357
  %1447 = vmatprep.subr.mxu0 0.0
  %1448 = vmatpush1.msra.mxu0 %v360
  %1449 = vmatprep.subr.mxu0 0.0
  %1450 = vmatpush1.msra.mxu0 0.0
  %1451 = vmatprep.subr.mxu0 0.0
  %1452 = vmatpush1.msra.mxu0 0.0
  %1453 = vmatprep.subr.mxu0 0.0
  %1454 = vmatpush1.msra.mxu0 0.0
  %1455 = vmatprep.subr.mxu0 0.0
  %1456 = vmatpush1.msra.mxu0 0.0
  %1457 = vmatprep.subr.mxu0 0.0
  %1458 = vmatpush1.msra.mxu0 0.0
  %1459 = vmatprep.subr.mxu0 0.0
  %1460 = vmatpush1.msra.mxu0 0.0
  %1461 = vmatprep.subr.mxu0 0.0
  %1462 = vmatpush1.msra.mxu0 0.0
  %1463 = vmatprep.subr.mxu0 0.0
  %1464 = vmatpush1.msra.mxu0 0.0
  %1465 = vmatprep.subr.mxu0 0.0
  %1466 = vmatpush1.msra.mxu0 0.0
  %1467 = vmatprep.subr.mxu0 0.0
  %1468 = vmatpush1.msra.mxu0 0.0
  %1469 = vmatprep.subr.mxu0 0.0
  %1470 = vmatpush1.msra.mxu0 0.0
  %1471 = vmatprep.subr.mxu0 0.0
  %1472 = vmatpush1.msra.mxu0 0.0
  %1473 = vmatprep.subr.mxu0 0.0
  %1474 = vmatpush1.msra.mxu0 0.0
  %1475 = vmatprep.subr.mxu0 0.0
  %1476 = vmatpush1.msra.mxu0 0.0
  %1477 = vmatprep.subr.mxu0 0.0
  %1478 = vmatpush1.msra.mxu0 0.0
  %1479 = vmatprep.subr.mxu0 0.0
  %1480 = vmatpush1.msra.mxu0 0.0
  %1481 = vmatprep.mubr.f32.mxu0 0.0
  %1482 = vmatmul.mubr.f32.gmra.mrb[0].mxu0 %v1345
  %v1483 = vpop.f32.mrb[0].mxu0
  %v1484 = vadd.f32 0.0, %v1483
  %v1485 = vpop.f32.mrb[0].mxu0
  %1486 = vdwg.mxu0
  %v1487 = vadd.f32 %v198, %v1413
  %v1488 = vxor.u32 %v1487, 2147483648
  %v1489 = vmul.f32 %v1488, 1.442695
  %v1490 = vpow.pop %v1489
  %v1491 = vadd.f32 %v1490, 1.0
  %v1492 = vrcp.pop %v1491
  %v1493 = vmul.f32 1.0, %v1492
  %v1494 = vadd.f32 %v200, %v1415
  %v1495 = vxor.u32 %v1494, 2147483648
  %v1496 = vmul.f32 %v1495, 1.442695
  %v1497 = vpow.pop %v1496
  %v1498 = vadd.f32 %v1497, 1.0
  %v1499 = vrcp.pop %v1498
  %v1500 = vmul.f32 1.0, %v1499
  %v1501 = vadd.f32 %v1484, %v521
  %v1502 = vmul.f32 %v1493, %v1501
  %v1503 = vadd.f32 %v305, %v1502
  %v1504 = vtanh.pop %v1503
  %v1505 = vsub.f32 1.0, %v1500
  %v1506 = vmul.f32 %v1505, %v1504
  %v1507 = vmul.f32 %v1500, %v1345
  %v1508 = vadd.f32 %v1506, %v1507
  %1509 = vmatprep.subr.mxu0 %v314
  %1510 = vmatpush1.msra.mxu0 %v313
  %1511 = vmatprep.subr.mxu0 %v317
  %1512 = vmatpush1.msra.mxu0 %v316
  %1513 = vmatprep.subr.mxu0 %v320
  %1514 = vmatpush1.msra.mxu0 %v319
  %1515 = vmatprep.subr.mxu0 %v323
  %1516 = vmatpush1.msra.mxu0 %v322
  %1517 = vmatprep.subr.mxu0 %v326
  %1518 = vmatpush1.msra.mxu0 %v325
  %1519 = vmatprep.subr.mxu0 %v329
  %1520 = vmatpush1.msra.mxu0 %v328
  %1521 = vmatprep.subr.mxu0 %v332
  %1522 = vmatpush1.msra.mxu0 %v331
  %1523 = vmatprep.subr.mxu0 %v335
  %1524 = vmatpush1.msra.mxu0 %v334
  %1525 = vmatprep.subr.mxu0 %v338
  %1526 = vmatpush1.msra.mxu0 %v337
  %1527 = vmatprep.subr.mxu0 %v341
  %1528 = vmatpush1.msra.mxu0 %v340
  %1529 = vmatprep.subr.mxu0 %v344
  %1530 = vmatpush1.msra.mxu0 %v343
  %1531 = vmatprep.subr.mxu0 %v347
  %1532 = vmatpush1.msra.mxu0 %v346
  %1533 = vmatprep.subr.mxu0 %v350
  %1534 = vmatpush1.msra.mxu0 %v349
  %1535 = vmatprep.subr.mxu0 %v353
  %1536 = vmatpush1.msra.mxu0 %v352
  %1537 = vmatprep.subr.mxu0 %v356
  %1538 = vmatpush1.msra.mxu0 %v355
  %1539 = vmatprep.subr.mxu0 %v359
  %1540 = vmatpush1.msra.mxu0 %v358
  %1541 = vmatprep.subr.mxu0 0.0
  %1542 = vmatpush1.msra.mxu0 0.0
  %1543 = vmatprep.subr.mxu0 0.0
  %1544 = vmatpush1.msra.mxu0 0.0
  %1545 = vmatprep.subr.mxu0 0.0
  %1546 = vmatpush1.msra.mxu0 0.0
  %1547 = vmatprep.subr.mxu0 0.0
  %1548 = vmatpush1.msra.mxu0 0.0
  %1549 = vmatprep.subr.mxu0 0.0
  %1550 = vmatpush1.msra.mxu0 0.0
  %1551 = vmatprep.subr.mxu0 0.0
  %1552 = vmatpush1.msra.mxu0 0.0
  %1553 = vmatprep.subr.mxu0 0.0
  %1554 = vmatpush1.msra.mxu0 0.0
  %1555 = vmatprep.subr.mxu0 0.0
  %1556 = vmatpush1.msra.mxu0 0.0
  %1557 = vmatprep.subr.mxu0 0.0
  %1558 = vmatpush1.msra.mxu0 0.0
  %1559 = vmatprep.subr.mxu0 0.0
  %1560 = vmatpush1.msra.mxu0 0.0
  %1561 = vmatprep.subr.mxu0 0.0
  %1562 = vmatpush1.msra.mxu0 0.0
  %1563 = vmatprep.subr.mxu0 0.0
  %1564 = vmatpush1.msra.mxu0 0.0
  %1565 = vmatprep.subr.mxu0 0.0
  %1566 = vmatpush1.msra.mxu0 0.0
  %1567 = vmatprep.subr.mxu0 0.0
  %1568 = vmatpush1.msra.mxu0 0.0
  %1569 = vmatprep.subr.mxu0 0.0
  %1570 = vmatpush1.msra.mxu0 0.0
  %1571 = vmatprep.subr.mxu0 0.0
  %1572 = vmatpush1.msra.mxu0 0.0
  %1573 = vmatprep.mubr.f32.mxu0 0.0
  %1574 = vmatmul.mubr.f32.gmra.mrb[0].mxu0 %v1508
  %v1575 = vpop.f32.mrb[0].mxu0
  %v1576 = vadd.f32 0.0, %v1575
  %v1577 = vpop.f32.mrb[0].mxu0
  %v1578 = vadd.f32 0.0, %v1577
  %1579 = vdwg.mxu0
  %1580 = vmatprep.subr.mxu0 0.0
  %1581 = vmatpush1.msra.mxu0 %v315
  %1582 = vmatprep.subr.mxu0 0.0
  %1583 = vmatpush1.msra.mxu0 %v318
  %1584 = vmatprep.subr.mxu0 0.0
  %1585 = vmatpush1.msra.mxu0 %v321
  %1586 = vmatprep.subr.mxu0 0.0
  %1587 = vmatpush1.msra.mxu0 %v324
  %1588 = vmatprep.subr.mxu0 0.0
  %1589 = vmatpush1.msra.mxu0 %v327
  %1590 = vmatprep.subr.mxu0 0.0
  %1591 = vmatpush1.msra.mxu0 %v330
  %1592 = vmatprep.subr.mxu0 0.0
  %1593 = vmatpush1.msra.mxu0 %v333
  %1594 = vmatprep.subr.mxu0 0.0
  %1595 = vmatpush1.msra.mxu0 %v336
  %1596 = vmatprep.subr.mxu0 0.0
  %1597 = vmatpush1.msra.mxu0 %v339
  %1598 = vmatprep.subr.mxu0 0.0
  %1599 = vmatpush1.msra.mxu0 %v342
  %1600 = vmatprep.subr.mxu0 0.0
  %1601 = vmatpush1.msra.mxu0 %v345
  %1602 = vmatprep.subr.mxu0 0.0
  %1603 = vmatpush1.msra.mxu0 %v348
  %1604 = vmatprep.subr.mxu0 0.0
  %1605 = vmatpush1.msra.mxu0 %v351
  %1606 = vmatprep.subr.mxu0 0.0
  %1607 = vmatpush1.msra.mxu0 %v354
  %1608 = vmatprep.subr.mxu0 0.0
  %1609 = vmatpush1.msra.mxu0 %v357
  %1610 = vmatprep.subr.mxu0 0.0
  %1611 = vmatpush1.msra.mxu0 %v360
  %1612 = vmatprep.subr.mxu0 0.0
  %1613 = vmatpush1.msra.mxu0 0.0
  %1614 = vmatprep.subr.mxu0 0.0
  %1615 = vmatpush1.msra.mxu0 0.0
  %1616 = vmatprep.subr.mxu0 0.0
  %1617 = vmatpush1.msra.mxu0 0.0
  %1618 = vmatprep.subr.mxu0 0.0
  %1619 = vmatpush1.msra.mxu0 0.0
  %1620 = vmatprep.subr.mxu0 0.0
  %1621 = vmatpush1.msra.mxu0 0.0
  %1622 = vmatprep.subr.mxu0 0.0
  %1623 = vmatpush1.msra.mxu0 0.0
  %1624 = vmatprep.subr.mxu0 0.0
  %1625 = vmatpush1.msra.mxu0 0.0
  %1626 = vmatprep.subr.mxu0 0.0
  %1627 = vmatpush1.msra.mxu0 0.0
  %1628 = vmatprep.subr.mxu0 0.0
  %1629 = vmatpush1.msra.mxu0 0.0
  %1630 = vmatprep.subr.mxu0 0.0
  %1631 = vmatpush1.msra.mxu0 0.0
  %1632 = vmatprep.subr.mxu0 0.0
  %1633 = vmatpush1.msra.mxu0 0.0
  %1634 = vmatprep.subr.mxu0 0.0
  %1635 = vmatpush1.msra.mxu0 0.0
  %1636 = vmatprep.subr.mxu0 0.0
  %1637 = vmatpush1.msra.mxu0 0.0
  %1638 = vmatprep.subr.mxu0 0.0
  %1639 = vmatpush1.msra.mxu0 0.0
  %1640 = vmatprep.subr.mxu0 0.0
  %1641 = vmatpush1.msra.mxu0 0.0
  %1642 = vmatprep.subr.mxu0 0.0
  %1643 = vmatpush1.msra.mxu0 0.0
  %1644 = vmatprep.mubr.f32.mxu0 0.0
  %1645 = vmatmul.mubr.f32.gmra.mrb[0].mxu0 %v1508
  %v1646 = vpop.f32.mrb[0].mxu0
  %v1647 = vadd.f32 0.0, %v1646
  %v1648 = vpop.f32.mrb[0].mxu0
  %1649 = vdwg.mxu0
  %v1650 = vadd.f32 %v204, %v1576
  %v1651 = vxor.u32 %v1650, 2147483648
  %v1652 = vmul.f32 %v1651, 1.442695
  %v1653 = vpow.pop %v1652
  %v1654 = vadd.f32 %v1653, 1.0
  %v1655 = vrcp.pop %v1654
  %v1656 = vmul.f32 1.0, %v1655
  %v1657 = vadd.f32 %v206, %v1578
  %v1658 = vxor.u32 %v1657, 2147483648
  %v1659 = vmul.f32 %v1658, 1.442695
  %v1660 = vpow.pop %v1659
  %v1661 = vadd.f32 %v1660, 1.0
  %v1662 = vrcp.pop %v1661
  %v1663 = vmul.f32 1.0, %v1662
  %v1664 = vadd.f32 %v1647, %v521
  %v1665 = vmul.f32 %v1656, %v1664
  %v1666 = vadd.f32 %v310, %v1665
  %v1667 = vtanh.pop %v1666
  %v1668 = vsub.f32 1.0, %v1663
  %v1669 = vmul.f32 %v1668, %v1667
  %v1670 = vmul.f32 %v1663, %v1508
  %v1671 = vadd.f32 %v1669, %v1670
  %v1672 = vld [vmem:[%s5] sm:$0xff]
  %v1673 = vld [vmem:[%s5 + $0x8] sm:$0xff]
  %v1674 = vld [vmem:[%s5 + $0x10] sm:$0xff]
  %v1675 = vld [vmem:[%s5 + $0x18] sm:$0xff]
  %v1676 = vld [vmem:[%s5 + $0x20] sm:$0xff]
  %v1677 = vld [vmem:[%s5 + $0x28] sm:$0xff]
  %v1678 = vld [vmem:[%s5 + $0x30] sm:$0xff]
  %v1679 = vld [vmem:[%s5 + $0x38] sm:$0xff]
  %v1680 = vld [vmem:[%s5 + $0x40] sm:$0xff]
  %v1681 = vld [vmem:[%s5 + $0x48] sm:$0xff]
  %v1682 = vld [vmem:[%s5 + $0x50] sm:$0xff]
  %v1683 = vld [vmem:[%s5 + $0x58] sm:$0xff]
  %v1684 = vld [vmem:[%s5 + $0x60] sm:$0xff]
  %v1685 = vld [vmem:[%s5 + $0x68] sm:$0xff]
  %v1686 = vld [vmem:[%s5 + $0x70] sm:$0xff]
  %v1687 = vld [vmem:[%s5 + $0x78] sm:$0xff]
  %v1688 = vld [vmem:[%s6] sm:$0x1]
  %v1690 = vlaneseq
  %v1691 = vshrl.u32 %v1690, 7
  %v1692 = vsub.s32 0, %v1691
  %v1693 = vrot.slane %v1688, %v1692
  %1695 = vmatprep.subr.mxu0 0.0
  %1696 = vmatpush1.msra.mxu0 %v1672
  %1697 = vmatprep.subr.mxu0 0.0
  %1698 = vmatpush1.msra.mxu0 %v1673
  %1699 = vmatprep.subr.mxu0 0.0
  %1700 = vmatpush1.msra.mxu0 %v1674
  %1701 = vmatprep.subr.mxu0 0.0
  %1702 = vmatpush1.msra.mxu0 %v1675
  %1703 = vmatprep.subr.mxu0 0.0
  %1704 = vmatpush1.msra.mxu0 %v1676
  %1705 = vmatprep.subr.mxu0 0.0
  %1706 = vmatpush1.msra.mxu0 %v1677
  %1707 = vmatprep.subr.mxu0 0.0
  %1708 = vmatpush1.msra.mxu0 %v1678
  %1709 = vmatprep.subr.mxu0 0.0
  %1710 = vmatpush1.msra.mxu0 %v1679
  %1711 = vmatprep.subr.mxu0 0.0
  %1712 = vmatpush1.msra.mxu0 %v1680
  %1713 = vmatprep.subr.mxu0 0.0
  %1714 = vmatpush1.msra.mxu0 %v1681
  %1715 = vmatprep.subr.mxu0 0.0
  %1716 = vmatpush1.msra.mxu0 %v1682
  %1717 = vmatprep.subr.mxu0 0.0
  %1718 = vmatpush1.msra.mxu0 %v1683
  %1719 = vmatprep.subr.mxu0 0.0
  %1720 = vmatpush1.msra.mxu0 %v1684
  %1721 = vmatprep.subr.mxu0 0.0
  %1722 = vmatpush1.msra.mxu0 %v1685
  %1723 = vmatprep.subr.mxu0 0.0
  %1724 = vmatpush1.msra.mxu0 %v1686
  %1725 = vmatprep.subr.mxu0 0.0
  %1726 = vmatpush1.msra.mxu0 %v1687
  %1727 = vmatprep.subr.mxu0 0.0
  %1728 = vmatpush1.msra.mxu0 0.0
  %1729 = vmatprep.subr.mxu0 0.0
  %1730 = vmatpush1.msra.mxu0 0.0
  %1731 = vmatprep.subr.mxu0 0.0
  %1732 = vmatpush1.msra.mxu0 0.0
  %1733 = vmatprep.subr.mxu0 0.0
  %1734 = vmatpush1.msra.mxu0 0.0
  %1735 = vmatprep.subr.mxu0 0.0
  %1736 = vmatpush1.msra.mxu0 0.0
  %1737 = vmatprep.subr.mxu0 0.0
  %1738 = vmatpush1.msra.mxu0 0.0
  %1739 = vmatprep.subr.mxu0 0.0
  %1740 = vmatpush1.msra.mxu0 0.0
  %1741 = vmatprep.subr.mxu0 0.0
  %1742 = vmatpush1.msra.mxu0 0.0
  %1743 = vmatprep.subr.mxu0 0.0
  %1744 = vmatpush1.msra.mxu0 0.0
  %1745 = vmatprep.subr.mxu0 0.0
  %1746 = vmatpush1.msra.mxu0 0.0
  %1747 = vmatprep.subr.mxu0 0.0
  %1748 = vmatpush1.msra.mxu0 0.0
  %1749 = vmatprep.subr.mxu0 0.0
  %1750 = vmatpush1.msra.mxu0 0.0
  %1751 = vmatprep.subr.mxu0 0.0
  %1752 = vmatpush1.msra.mxu0 0.0
  %1753 = vmatprep.subr.mxu0 0.0
  %1754 = vmatpush1.msra.mxu0 0.0
  %1755 = vmatprep.subr.mxu0 0.0
  %1756 = vmatpush1.msra.mxu0 0.0
  %1757 = vmatprep.subr.mxu0 0.0
  %1758 = vmatpush1.msra.mxu0 0.0
  %1759 = vmatprep.mubr.f32.mxu0 0.0
  %1760 = vmatmul.mubr.f32.gmra.mrb[0].mxu0 %v1671
  %v1761 = vpop.f32.mrb[0].mxu0
  %v1762 = vadd.f32 %v1693, %v1761
  %v1763 = vpop.f32.mrb[0].mxu0
  %1764 = vdwg.mxu0
  %v1765 = vtanh.pop %v1762
  %v1766 = vld [vmem:[%s7] sm:$0xff]
  %v1767 = vld [vmem:[%s7 + $0x8] sm:$0xff]
  %v1768 = vld [vmem:[%s7 + $0x10] sm:$0xff]
  %v1769 = vld [vmem:[%s7 + $0x18] sm:$0xff]
  %v1770 = vld [vmem:[%s7 + $0x20] sm:$0xff]
  %v1771 = vld [vmem:[%s7 + $0x28] sm:$0xff]
  %v1772 = vld [vmem:[%s7 + $0x30] sm:$0x3]
  %v1773 = vld [vmem:[%s8] sm:$0x1]
  %v1775 = vlaneseq
  %v1776 = vshrl.u32 %v1775, 7
  %v1777 = vsub.s32 0, %v1776
  %v1778 = vrot.slane %v1773, %v1777
  %vm1780 = vcmask 408576
  %v1782 = vsel %vm1780, %v1765, 0
  %vm1784 = vcmask 1041408
  %v1786 = vsel %vm1784, %v1772, 0
  %1788 = vmatprep.subr.mxu0 0.0
  %1789 = vmatpush1.msra.mxu0 %v1766
  %1790 = vmatprep.subr.mxu0 0.0
  %1791 = vmatpush1.msra.mxu0 %v1767
  %1792 = vmatprep.subr.mxu0 0.0
  %1793 = vmatpush1.msra.mxu0 %v1768
  %1794 = vmatprep.subr.mxu0 0.0
  %1795 = vmatpush1.msra.mxu0 %v1769
  %1796 = vmatprep.subr.mxu0 0.0
  %1797 = vmatpush1.msra.mxu0 %v1770
  %1798 = vmatprep.subr.mxu0 0.0
  %1799 = vmatpush1.msra.mxu0 %v1771
  %1800 = vmatprep.subr.mxu0 0.0
  %1801 = vmatpush1.msra.mxu0 %v1786
  %1802 = vmatprep.subr.mxu0 0.0
  %1803 = vmatpush1.msra.mxu0 0.0
  %1804 = vmatprep.subr.mxu0 0.0
  %1805 = vmatpush1.msra.mxu0 0.0
  %1806 = vmatprep.subr.mxu0 0.0
  %1807 = vmatpush1.msra.mxu0 0.0
  %1808 = vmatprep.subr.mxu0 0.0
  %1809 = vmatpush1.msra.mxu0 0.0
  %1810 = vmatprep.subr.mxu0 0.0
  %1811 = vmatpush1.msra.mxu0 0.0
  %1812 = vmatprep.subr.mxu0 0.0
  %1813 = vmatpush1.msra.mxu0 0.0
  %1814 = vmatprep.subr.mxu0 0.0
  %1815 = vmatpush1.msra.mxu0 0.0
  %1816 = vmatprep.subr.mxu0 0.0
  %1817 = vmatpush1.msra.mxu0 0.0
  %1818 = vmatprep.subr.mxu0 0.0
  %1819 = vmatpush1.msra.mxu0 0.0
  %1820 = vmatprep.subr.mxu0 0.0
  %1821 = vmatpush1.msra.mxu0 0.0
  %1822 = vmatprep.subr.mxu0 0.0
  %1823 = vmatpush1.msra.mxu0 0.0
  %1824 = vmatprep.subr.mxu0 0.0
  %1825 = vmatpush1.msra.mxu0 0.0
  %1826 = vmatprep.subr.mxu0 0.0
  %1827 = vmatpush1.msra.mxu0 0.0
  %1828 = vmatprep.subr.mxu0 0.0
  %1829 = vmatpush1.msra.mxu0 0.0
  %1830 = vmatprep.subr.mxu0 0.0
  %1831 = vmatpush1.msra.mxu0 0.0
  %1832 = vmatprep.subr.mxu0 0.0
  %1833 = vmatpush1.msra.mxu0 0.0
  %1834 = vmatprep.subr.mxu0 0.0
  %1835 = vmatpush1.msra.mxu0 0.0
  %1836 = vmatprep.subr.mxu0 0.0
  %1837 = vmatpush1.msra.mxu0 0.0
  %1838 = vmatprep.subr.mxu0 0.0
  %1839 = vmatpush1.msra.mxu0 0.0
  %1840 = vmatprep.subr.mxu0 0.0
  %1841 = vmatpush1.msra.mxu0 0.0
  %1842 = vmatprep.subr.mxu0 0.0
  %1843 = vmatpush1.msra.mxu0 0.0
  %1844 = vmatprep.subr.mxu0 0.0
  %1845 = vmatpush1.msra.mxu0 0.0
  %1846 = vmatprep.subr.mxu0 0.0
  %1847 = vmatpush1.msra.mxu0 0.0
  %1848 = vmatprep.subr.mxu0 0.0
  %1849 = vmatpush1.msra.mxu0 0.0
  %1850 = vmatprep.subr.mxu0 0.0
  %1851 = vmatpush1.msra.mxu0 0.0
  %1852 = vmatprep.mubr.f32.mxu0 0.0
  %1853 = vmatmul.mubr.f32.gmra.mrb[0].mxu0 %v1782
  %v1854 = vpop.f32.mrb[0].mxu0
  %v1855 = vadd.f32 %v1778, %v1854
  %v1856 = vpop.f32.mrb[0].mxu0
  %1857 = vdwg.mxu0
  %1858 = vst [vmem:[%s9] sm:$0xff] %v1855
  // Predicated region
  $region38: #{encoder_z0_rnn_forward.1} parent=0 // pred_check
    _
  $region39: #{encoder_z0_rnn_forward.1} parent=0 // pred_check_branch
    %1860 = sbr.rel (0) target = $region41
  $region40: #{encoder_z0_rnn_forward.1} parent=0 // pred_region
    _
  $region41: #{encoder_z0_rnn_forward.1} parent=0 // pred_fallthru
    _
  // Predicated region
  $region42: #{encoder_z0_rnn_forward.1} parent=0 // pred_check
    _
  $region43: #{encoder_z0_rnn_forward.1} parent=0 // pred_check_branch
    %1862 = sbr.rel (0) target = $region45
  $region44: #{encoder_z0_rnn_forward.1} parent=0 // pred_region
    _
  $region45: #{encoder_z0_rnn_forward.1} parent=0 // pred_fallthru
    _

</llo_original>
